<compile_context>
chip_gen: v7x
topology: tpu7x:2x2x1
jax: 0.10.0
libtpu: 0.0.40
codegen_flags: <defaults>
</compile_context>

<pallas_src>
import jax
import jax.numpy as jnp
from jax.experimental import pallas as pl
from jax.experimental.pallas import tpu as pltpu


def _processor_kernel(cost_ref, inv_deg_ref, emb_ref, w1t_ref, w2t_ref, b_ref,
                      out_ref):
    # Per-grid-step refs:
    #   cost_ref          : (BB, N, N)
    #   inv_deg_ref       : (BB, N, 1)   precomputed 1/degree
    #   emb_ref, out_ref  : (BB, N, D)
    #   w1t_ref, w2t_ref  : (D, D)       already transposed: x @ Wi.T == x @ wit
    #   b_ref             : (1, D)
    cost = cost_ref[...]
    emb = emb_ref[...]

    # sum_neighbors[b, j, d] = (sum_i cost[b, i, j] * emb[b, i, d]) / degree[b, j]
    # dot_general contracting dim 1 of both operands (batch dim 0): feeds the MXU
    # without materializing cost.T (no vxpose competing with MXU pushes).
    agg = jnp.einsum('bij,bid->bjd', cost, emb,
                     preferred_element_type=jnp.float32)            # (BB, N, D)
    sum_neighbors = agg * inv_deg_ref[...]                           # (BB, N, D)

    # relu( emb @ W1.T + sum_neighbors @ W2.T + b ), with the batch block
    # flattened into the MXU M dimension (sublane collapse; no-op when N % 8 == 0).
    bb, n, d = emb.shape
    emb2 = emb.reshape(bb * n, d)
    sn2 = sum_neighbors.reshape(bb * n, d)
    h = (jnp.dot(emb2, w1t_ref[...], preferred_element_type=jnp.float32)
         + jnp.dot(sn2, w2t_ref[...], preferred_element_type=jnp.float32)
         + b_ref[...])                                               # (BB*N, D)
    out_ref[...] = jnp.maximum(h, 0.0).reshape(bb, n, d).astype(out_ref.dtype)


def _round_up(x, m):
    return ((x + m - 1) // m) * m


def _vmem_tile_bytes(rows, cols, itemsize=4):
    # VMEM layouts pad the trailing two dims to (8 sublanes, 128 lanes).
    return _round_up(rows, 8) * _round_up(cols, 128) * itemsize


def _vmem_budget():
    """(per-step footprint budget, vmem_limit_bytes) sized from the hardware."""
    try:
        cap = int(pltpu.get_tpu_info().vmem_capacity_bytes)
    except Exception:
        cap = 64 * 1024 * 1024          # conservative fallback: v7x-class 64 MiB
    vmem_limit = min((cap * 3) // 4, 96 * 1024 * 1024)  # 96 MiB v5e/v6e, 48 MiB v7x
    return vmem_limit // 2, vmem_limit


def _pick_batch_block(batch, n, d, budget_bytes):
    """Largest batch block whose per-step VMEM footprint fits the budget.

    Prefers >= 4 grid steps (>= 2 per v7x TensorCore + intra-core pipelining)
    and an even step count (balanced megacore split).  Non-divisor BB is allowed
    (grid uses cdiv; Pallas masks the tail block).
    """

    def footprint(bb):
        streams = 2 * bb * (_vmem_tile_bytes(n, n)            # cost (double-buffered)
                            + _vmem_tile_bytes(n, 1)          # 1/degree
                            + 2 * _vmem_tile_bytes(n, d))     # emb in + out
        temps = 4 * bb * _vmem_tile_bytes(n, d)                # agg, sum_neighbors, h, relu
        consts = 4 * _vmem_tile_bytes(d, d) + 2 * _vmem_tile_bytes(1, d)
        return streams + temps + consts

    bb_max = 1
    for bb in range(2, batch + 1):
        if footprint(bb) <= budget_bytes:
            bb_max = bb
        else:
            break

    def steps(bb):
        return pl.cdiv(batch, bb)

    for min_steps, want_even in ((4, True), (4, False), (2, True), (2, False),
                                 (1, False)):
        cands = [bb for bb in range(1, bb_max + 1)
                 if steps(bb) >= min_steps
                 and (not want_even or steps(bb) % 2 == 0)]
        if cands:
            best = max(cands)
            divs = [bb for bb in cands if batch % bb == 0]
            # Prefer an exact divisor (no masked tail) unless it costs > ~25% BB.
            if divs and 4 * max(divs) >= 3 * best:
                return max(divs)
            return best
    return 1


def processor_network(embeddings, adjacency_matrix, cost_matrix, weight, bias):
    """embeddings: (B, N, D); adjacency/cost: (B, N, N); weight: (D, 2D); bias: (D,)."""
    B, N, D = embeddings.shape

    # 1/degree computed once in the wrapper: the adjacency matrix never enters
    # the kernel (saves a full double-buffered NxN input stream + in-kernel
    # cross-lane reduce).  No clamping: degree == 0 gives inf/nan like torch.
    degree = adjacency_matrix.sum(axis=-1)                                # (B, N)
    inv_degree = (1.0 / degree)[..., None].astype(jnp.float32)            # (B, N, 1)

    # Split the Linear(2D, D):  cat([emb, sn]) @ W.T == emb @ W1.T + sn @ W2.T
    w1t = weight[:, :D].T                                                 # (D, D)
    w2t = weight[:, D:].T                                                 # (D, D)
    b2d = bias.reshape(1, D)

    budget, vmem_limit = _vmem_budget()
    BB = _pick_batch_block(B, N, D, budget)
    grid = (pl.cdiv(B, BB),)

    # TODO(synk): for very large N (per-batch N*N cost block >> budget) add a
    # second "parallel" grid axis tiling the output-node dim j.
    # TODO(synk): streaming `cost` as bf16 would halve the dominant HBM stream
    # but breaks the 1e-5 numerical-parity requirement, so it is not done here.

    def build(const_kwargs):
        def const(shape):
            return pl.BlockSpec(shape, lambda b: (0,) * len(shape), **const_kwargs)

        return pl.pallas_call(
            _processor_kernel,
            out_shape=jax.ShapeDtypeStruct((B, N, D), embeddings.dtype),
            grid_spec=pltpu.PrefetchScalarGridSpec(
                num_scalar_prefetch=0,
                grid=grid,
                in_specs=[
                    pl.BlockSpec((BB, N, N), lambda b: (b, 0, 0)),    # cost
                    pl.BlockSpec((BB, N, 1), lambda b: (b, 0, 0)),    # 1/degree
                    pl.BlockSpec((BB, N, D), lambda b: (b, 0, 0)),    # embeddings
                    const((D, D)),                                    # W1.T
                    const((D, D)),                                    # W2.T
                    const((1, D)),                                    # bias
                ],
                out_specs=pl.BlockSpec((BB, N, D), lambda b: (b, 0, 0)),
            ),
            compiler_params=pltpu.CompilerParams(
                dimension_semantics=("parallel",),
                vmem_limit_bytes=vmem_limit),
        )(cost_matrix, inv_degree, embeddings, w1t, w2t, b2d)

    try:
        # Loop-invariant operands: single pipeline buffer (frees VMEM, no refetch).
        return build({"pipeline_mode": pl.Buffered(1)})
    except Exception:
        # Fallback if this jax build rejects pipeline_mode on pallas_call specs.
        return build({})


def _reference(embeddings, adjacency_matrix, cost_matrix, weight, bias):
    degree = adjacency_matrix.sum(-1)[:, :, None]                          # (B, N, 1)
    neighbor = embeddings[:, :, None, :] * cost_matrix[:, :, :, None]      # (B, N, N, D)
    sum_neighbors = neighbor.sum(axis=1) / degree                          # (B, N, D)
    concat = jnp.concatenate([embeddings, sum_neighbors], axis=-1)         # (B, N, 2D)
    return jax.nn.relu(concat @ weight.T + bias)


if __name__ == "__main__":
    B, N, D = 2, 8, 32          # batch, num nodes (seq), embedding_dim
    key = jax.random.PRNGKey(0)
    k_emb, k_cost, k_adj, k_w, k_b = jax.random.split(key, 5)

    embeddings = jax.random.normal(k_emb, (B, N, D), dtype=jnp.float32)
    cost_matrix = jax.random.uniform(k_cost, (B, N, N), dtype=jnp.float32)
    # 0/1 adjacency with self-loops so degree > 0 (matches PyTorch usage).
    adjacency = (jax.random.uniform(k_adj, (B, N, N)) > 0.5).astype(jnp.float32)
    adjacency = jnp.maximum(adjacency, jnp.eye(N, dtype=jnp.float32)[None])

    # Deterministic Linear(2D, D) parameters (same shapes as nn.Linear).
    bound = 1.0 / jnp.sqrt(2.0 * D)
    weight = jax.random.uniform(k_w, (D, 2 * D), minval=-bound, maxval=bound,
                                dtype=jnp.float32)
    bias = jax.random.uniform(k_b, (D,), minval=-bound, maxval=bound,
                              dtype=jnp.float32)

    out = processor_network(embeddings, adjacency, cost_matrix, weight, bias)
    out = jax.block_until_ready(out)

    ref = _reference(embeddings, adjacency, cost_matrix, weight, bias)
    assert out.shape == (B, N, D)
    assert jnp.allclose(out, ref, atol=1e-5, rtol=1e-5)

    print("KERNEL_OK")
</pallas_src>

<mosaic_0001>
module attributes {stable_mosaic.version = 11 : i64} {
  func.func @_processor_kernel(%arg0: i32, %arg1: memref<1x8x8xf32, #tpu.memory_space<vmem>>, %arg2: memref<1x8x1xf32, #tpu.memory_space<vmem>>, %arg3: memref<1x8x32xf32, #tpu.memory_space<vmem>>, %arg4: memref<32x32xf32, #tpu.memory_space<vmem>>, %arg5: memref<32x32xf32, #tpu.memory_space<vmem>>, %arg6: memref<1x32xf32, #tpu.memory_space<vmem>>, %arg7: memref<1x8x32xf32, #tpu.memory_space<vmem>>) attributes {dimension_semantics = [#tpu.dimension_semantics<parallel>], iteration_bounds = array<i64: 2>, scalar_prefetch = 0 : i64, scratch_operands = 0 : i64, tpu.core_type = #tpu.core_type<tc>, window_params = [{transform_indices = @transform_0, window_bounds = array<i64: 1, 8, 8>}, {transform_indices = @transform_1, window_bounds = array<i64: 1, 8, 1>}, {transform_indices = @transform_2, window_bounds = array<i64: 1, 8, 32>}, {pipeline_mode = #tpu.pipeline_mode<synchronous>, transform_indices = @transform_3, window_bounds = array<i64: 32, 32>}, {pipeline_mode = #tpu.pipeline_mode<synchronous>, transform_indices = @transform_4, window_bounds = array<i64: 32, 32>}, {pipeline_mode = #tpu.pipeline_mode<synchronous>, transform_indices = @transform_5, window_bounds = array<i64: 1, 32>}, {transform_indices = @transform_6, window_bounds = array<i64: 1, 8, 32>}]} {
    %c0 = arith.constant 0 : index
    %c0_0 = arith.constant 0 : index
    %c0_1 = arith.constant 0 : index
    %0 = vector.load %arg1[%c0, %c0_0, %c0_1] : memref<1x8x8xf32, #tpu.memory_space<vmem>>, vector<1x8x8xf32>
    %c0_2 = arith.constant 0 : index
    %c0_3 = arith.constant 0 : index
    %c0_4 = arith.constant 0 : index
    %1 = vector.load %arg3[%c0_2, %c0_3, %c0_4] : memref<1x8x32xf32, #tpu.memory_space<vmem>>, vector<1x8x32xf32>
    "tpu.trace_start"() <{level = 10 : i32, message = "bij,bid->bjd"}> : () -> ()
    %cst = arith.constant dense<0.000000e+00> : vector<1x8x32xf32>
    %2 = tpu.matmul %0, %1, %cst {dimension_numbers = #tpu.dot_dimension_numbers<[1], [1], [2], [2], [0, 0, 0, 2, 1, 2], [0], [0]>} : vector<1x8x8xf32>, vector<1x8x32xf32>, vector<1x8x32xf32> -> vector<1x8x32xf32>
    "tpu.trace_stop"() : () -> ()
    %c0_5 = arith.constant 0 : index
    %c0_6 = arith.constant 0 : index
    %c0_7 = arith.constant 0 : index
    %3 = vector.load %arg2[%c0_5, %c0_6, %c0_7] : memref<1x8x1xf32, #tpu.memory_space<vmem>>, vector<1x8x1xf32>
    %4 = vector.broadcast %3 : vector<1x8x1xf32> to vector<1x8x32xf32>
    %5 = arith.mulf %2, %4 : vector<1x8x32xf32>
    %6 = vector.shape_cast %1 : vector<1x8x32xf32> to vector<8x32xf32>
    %7 = vector.shape_cast %5 : vector<1x8x32xf32> to vector<8x32xf32>
    %c0_8 = arith.constant 0 : index
    %c0_9 = arith.constant 0 : index
    %8 = vector.load %arg4[%c0_8, %c0_9] : memref<32x32xf32, #tpu.memory_space<vmem>>, vector<32x32xf32>
    %cst_10 = arith.constant dense<0.000000e+00> : vector<8x32xf32>
    %9 = tpu.matmul %6, %8, %cst_10 {dimension_numbers = #tpu.dot_dimension_numbers<[1], [0], [0], [1], [0, 0, 1, 1], [], []>} : vector<8x32xf32>, vector<32x32xf32>, vector<8x32xf32> -> vector<8x32xf32>
    %c0_11 = arith.constant 0 : index
    %c0_12 = arith.constant 0 : index
    %10 = vector.load %arg5[%c0_11, %c0_12] : memref<32x32xf32, #tpu.memory_space<vmem>>, vector<32x32xf32>
    %cst_13 = arith.constant dense<0.000000e+00> : vector<8x32xf32>
    %11 = tpu.matmul %7, %10, %cst_13 {dimension_numbers = #tpu.dot_dimension_numbers<[1], [0], [0], [1], [0, 0, 1, 1], [], []>} : vector<8x32xf32>, vector<32x32xf32>, vector<8x32xf32> -> vector<8x32xf32>
    %12 = arith.addf %9, %11 : vector<8x32xf32>
    %c0_14 = arith.constant 0 : index
    %c0_15 = arith.constant 0 : index
    %13 = vector.load %arg6[%c0_14, %c0_15] : memref<1x32xf32, #tpu.memory_space<vmem>>, vector<1x32xf32>
    %14 = vector.broadcast %13 : vector<1x32xf32> to vector<8x32xf32>
    %15 = arith.addf %12, %14 : vector<8x32xf32>
    %cst_16 = arith.constant 0.000000e+00 : f32
    %16 = vector.broadcast %cst_16 : f32 to vector<8x32xf32>
    %17 = arith.maximumf %15, %16 : vector<8x32xf32>
    %18 = vector.shape_cast %17 : vector<8x32xf32> to vector<1x8x32xf32>
    %c0_17 = arith.constant 0 : index
    %c0_18 = arith.constant 0 : index
    %c0_19 = arith.constant 0 : index
    %19 = vector.load %arg7[%c0_17, %c0_18, %c0_19] : memref<1x8x32xf32, #tpu.memory_space<vmem>>, vector<1x8x32xf32>
    tpu.vector_store %arg7[%c0_17, %c0_18, %c0_19], %18 {strides = array<i32>} : memref<1x8x32xf32, #tpu.memory_space<vmem>>, vector<1x8x32xf32>,
    return
  }
  func.func @transform_0(%arg0: i32) -> (i32, i32, i32) {
    %c0_i32 = arith.constant 0 : i32
    %c0_i32_0 = arith.constant 0 : i32
    %c0_i32_1 = arith.constant 0 : i32
    return %arg0, %c0_i32, %c0_i32_0 : i32, i32, i32
  }
  func.func @transform_1(%arg0: i32) -> (i32, i32, i32) {
    %c0_i32 = arith.constant 0 : i32
    %c0_i32_0 = arith.constant 0 : i32
    %c0_i32_1 = arith.constant 0 : i32
    return %arg0, %c0_i32, %c0_i32_0 : i32, i32, i32
  }
  func.func @transform_2(%arg0: i32) -> (i32, i32, i32) {
    %c0_i32 = arith.constant 0 : i32
    %c0_i32_0 = arith.constant 0 : i32
    %c0_i32_1 = arith.constant 0 : i32
    return %arg0, %c0_i32, %c0_i32_0 : i32, i32, i32
  }
  func.func @transform_3(%arg0: i32) -> (i32, i32) {
    %c0_i32 = arith.constant 0 : i32
    %c0_i32_0 = arith.constant 0 : i32
    %c0_i32_1 = arith.constant 0 : i32
    return %c0_i32, %c0_i32_0 : i32, i32
  }
  func.func @transform_4(%arg0: i32) -> (i32, i32) {
    %c0_i32 = arith.constant 0 : i32
    %c0_i32_0 = arith.constant 0 : i32
    %c0_i32_1 = arith.constant 0 : i32
    return %c0_i32, %c0_i32_0 : i32, i32
  }
  func.func @transform_5(%arg0: i32) -> (i32, i32) {
    %c0_i32 = arith.constant 0 : i32
    %c0_i32_0 = arith.constant 0 : i32
    %c0_i32_1 = arith.constant 0 : i32
    return %c0_i32, %c0_i32_0 : i32, i32
  }
  func.func @transform_6(%arg0: i32) -> (i32, i32, i32) {
    %c0_i32 = arith.constant 0 : i32
    %c0_i32_0 = arith.constant 0 : i32
    %c0_i32_1 = arith.constant 0 : i32
    return %arg0, %c0_i32, %c0_i32_0 : i32, i32, i32
  }
}

module attributes {stable_mosaic.version = 11 : i64} {
  func.func @_processor_kernel(%arg0: i32, %arg1: memref<1x8x8xf32, #tpu.memory_space<vmem>>, %arg2: memref<1x8x1xf32, #tpu.memory_space<vmem>>, %arg3: memref<1x8x32xf32, #tpu.memory_space<vmem>>, %arg4: memref<32x32xf32, #tpu.memory_space<vmem>>, %arg5: memref<32x32xf32, #tpu.memory_space<vmem>>, %arg6: memref<1x32xf32, #tpu.memory_space<vmem>>, %arg7: memref<1x8x32xf32, #tpu.memory_space<vmem>>) attributes {dimension_semantics = [#tpu.dimension_semantics<parallel>], iteration_bounds = array<i64: 2>, scalar_prefetch = 0 : i64, scratch_operands = 0 : i64, tpu.core_type = #tpu.core_type<tc>, window_params = [{transform_indices = @transform_0, window_bounds = array<i64: 1, 8, 8>}, {transform_indices = @transform_1, window_bounds = array<i64: 1, 8, 1>}, {transform_indices = @transform_2, window_bounds = array<i64: 1, 8, 32>}, {pipeline_mode = #tpu.pipeline_mode<synchronous>, transform_indices = @transform_3, window_bounds = array<i64: 32, 32>}, {pipeline_mode = #tpu.pipeline_mode<synchronous>, transform_indices = @transform_4, window_bounds = array<i64: 32, 32>}, {pipeline_mode = #tpu.pipeline_mode<synchronous>, transform_indices = @transform_5, window_bounds = array<i64: 1, 32>}, {transform_indices = @transform_6, window_bounds = array<i64: 1, 8, 32>}]} {
    %c0 = arith.constant 0 : index
    %c0_0 = arith.constant 0 : index
    %c0_1 = arith.constant 0 : index
    %0 = vector.load %arg1[%c0, %c0_0, %c0_1] : memref<1x8x8xf32, #tpu.memory_space<vmem>>, vector<1x8x8xf32>
    %c0_2 = arith.constant 0 : index
    %c0_3 = arith.constant 0 : index
    %c0_4 = arith.constant 0 : index
    %1 = vector.load %arg3[%c0_2, %c0_3, %c0_4] : memref<1x8x32xf32, #tpu.memory_space<vmem>>, vector<1x8x32xf32>
    "tpu.trace_start"() <{level = 10 : i32, message = "bij,bid->bjd"}> : () -> ()
    %cst = arith.constant dense<0.000000e+00> : vector<1x8x32xf32>
    %2 = tpu.matmul %0, %1, %cst {dimension_numbers = #tpu.dot_dimension_numbers<[1], [1], [2], [2], [0, 0, 0, 2, 1, 2], [0], [0]>} : vector<1x8x8xf32>, vector<1x8x32xf32>, vector<1x8x32xf32> -> vector<1x8x32xf32>
    "tpu.trace_stop"() : () -> ()
    %c0_5 = arith.constant 0 : index
    %c0_6 = arith.constant 0 : index
    %c0_7 = arith.constant 0 : index
    %3 = vector.load %arg2[%c0_5, %c0_6, %c0_7] : memref<1x8x1xf32, #tpu.memory_space<vmem>>, vector<1x8x1xf32>
    %4 = vector.broadcast %3 : vector<1x8x1xf32> to vector<1x8x32xf32>
    %5 = arith.mulf %2, %4 : vector<1x8x32xf32>
    %6 = vector.shape_cast %1 : vector<1x8x32xf32> to vector<8x32xf32>
    %7 = vector.shape_cast %5 : vector<1x8x32xf32> to vector<8x32xf32>
    %c0_8 = arith.constant 0 : index
    %c0_9 = arith.constant 0 : index
    %8 = vector.load %arg4[%c0_8, %c0_9] : memref<32x32xf32, #tpu.memory_space<vmem>>, vector<32x32xf32>
    %cst_10 = arith.constant dense<0.000000e+00> : vector<8x32xf32>
    %9 = tpu.matmul %6, %8, %cst_10 {dimension_numbers = #tpu.dot_dimension_numbers<[1], [0], [0], [1], [0, 0, 1, 1], [], []>} : vector<8x32xf32>, vector<32x32xf32>, vector<8x32xf32> -> vector<8x32xf32>
    %c0_11 = arith.constant 0 : index
    %c0_12 = arith.constant 0 : index
    %10 = vector.load %arg5[%c0_11, %c0_12] : memref<32x32xf32, #tpu.memory_space<vmem>>, vector<32x32xf32>
    %cst_13 = arith.constant dense<0.000000e+00> : vector<8x32xf32>
    %11 = tpu.matmul %7, %10, %cst_13 {dimension_numbers = #tpu.dot_dimension_numbers<[1], [0], [0], [1], [0, 0, 1, 1], [], []>} : vector<8x32xf32>, vector<32x32xf32>, vector<8x32xf32> -> vector<8x32xf32>
    %12 = arith.addf %9, %11 : vector<8x32xf32>
    %c0_14 = arith.constant 0 : index
    %c0_15 = arith.constant 0 : index
    %13 = vector.load %arg6[%c0_14, %c0_15] : memref<1x32xf32, #tpu.memory_space<vmem>>, vector<1x32xf32>
    %14 = vector.broadcast %13 : vector<1x32xf32> to vector<8x32xf32>
    %15 = arith.addf %12, %14 : vector<8x32xf32>
    %cst_16 = arith.constant 0.000000e+00 : f32
    %16 = vector.broadcast %cst_16 : f32 to vector<8x32xf32>
    %17 = arith.maximumf %15, %16 : vector<8x32xf32>
    %18 = vector.shape_cast %17 : vector<8x32xf32> to vector<1x8x32xf32>
    %c0_17 = arith.constant 0 : index
    %c0_18 = arith.constant 0 : index
    %c0_19 = arith.constant 0 : index
    %19 = vector.load %arg7[%c0_17, %c0_18, %c0_19] : memref<1x8x32xf32, #tpu.memory_space<vmem>>, vector<1x8x32xf32>
    tpu.vector_store %arg7[%c0_17, %c0_18, %c0_19], %18 {strides = array<i32>} : memref<1x8x32xf32, #tpu.memory_space<vmem>>, vector<1x8x32xf32>,
    return
  }
  func.func @transform_0(%arg0: i32) -> (i32, i32, i32) {
    %c0_i32 = arith.constant 0 : i32
    %c0_i32_0 = arith.constant 0 : i32
    %c0_i32_1 = arith.constant 0 : i32
    return %arg0, %c0_i32, %c0_i32_0 : i32, i32, i32
  }
  func.func @transform_1(%arg0: i32) -> (i32, i32, i32) {
    %c0_i32 = arith.constant 0 : i32
    %c0_i32_0 = arith.constant 0 : i32
    %c0_i32_1 = arith.constant 0 : i32
    return %arg0, %c0_i32, %c0_i32_0 : i32, i32, i32
  }
  func.func @transform_2(%arg0: i32) -> (i32, i32, i32) {
    %c0_i32 = arith.constant 0 : i32
    %c0_i32_0 = arith.constant 0 : i32
    %c0_i32_1 = arith.constant 0 : i32
    return %arg0, %c0_i32, %c0_i32_0 : i32, i32, i32
  }
  func.func @transform_3(%arg0: i32) -> (i32, i32) {
    %c0_i32 = arith.constant 0 : i32
    %c0_i32_0 = arith.constant 0 : i32
    %c0_i32_1 = arith.constant 0 : i32
    return %c0_i32, %c0_i32_0 : i32, i32
  }
  func.func @transform_4(%arg0: i32) -> (i32, i32) {
    %c0_i32 = arith.constant 0 : i32
    %c0_i32_0 = arith.constant 0 : i32
    %c0_i32_1 = arith.constant 0 : i32
    return %c0_i32, %c0_i32_0 : i32, i32
  }
  func.func @transform_5(%arg0: i32) -> (i32, i32) {
    %c0_i32 = arith.constant 0 : i32
    %c0_i32_0 = arith.constant 0 : i32
    %c0_i32_1 = arith.constant 0 : i32
    return %c0_i32, %c0_i32_0 : i32, i32
  }
  func.func @transform_6(%arg0: i32) -> (i32, i32, i32) {
    %c0_i32 = arith.constant 0 : i32
    %c0_i32_0 = arith.constant 0 : i32
    %c0_i32_1 = arith.constant 0 : i32
    return %arg0, %c0_i32, %c0_i32_0 : i32, i32, i32
  }
}

</mosaic_0001>

<llo_original>
// kernel: tpu_custom_call.1
$region0: #{tpu_custom_call.1}
  #allocation0 [shape = 'u32[]', space=smem, size = 0x4, offset = 0x4, fixed_abs, tag = 'smem constant byte address 0x4 - core index']
  #allocation1 [shape = 'u32[144,128]{1,0:T(1,128)}', space=vmem, size = 0x12000, scoped, tag = 'internal scratch']
  %s0 = inlined_call_operand.hbm [shape: f32[2,8,8], index: 0, kind: input, shape index: {}]
  %s1 = inlined_call_operand.vmem [shape: f32[2,8,1], index: 1, kind: input, shape index: {}]
  %s2 = inlined_call_operand.hbm [shape: f32[2,8,32], index: 2, kind: input, shape index: {}]
  %s3 = inlined_call_operand.hbm [shape: f32[32,32], index: 3, kind: input, shape index: {}]
  %s4 = inlined_call_operand.vmem [shape: f32[32,32], index: 4, kind: input, shape index: {}]
  %s5 = inlined_call_operand.vmem [shape: f32[1,32], index: 5, kind: input, shape index: {}]
  %s6 = inlined_call_operand.hbm [shape: f32[2,8,32], index: 6, kind: output, shape index: {}]
  %s7 = sld [smem:[#allocation0]]
  $region69: #{tpu_custom_call.1} parent=0
    _
  %s9 = ssub.s32 1, %s7
  %s10 = scalar_select 0, %s9, %s7
  $region1: #{tpu_custom_call.1} parent=0
    #allocation2 [shape = 'u8[8192]{0}', space=vmem, size = 0x2000, scoped, tag = 'input window, operand 0']
    #allocation3 [shape = 's32[2]{0}', space=sflag, size = 0x8, scoped, tag = 'scoped memory for tpu_custom_call.1']
    #allocation4 [shape = 's32[2]{0}', space=sflag, size = 0x8, scoped, tag = 'scoped memory for tpu_custom_call.1']
    #allocation5 [shape = 'u8[8192]{0}', space=vmem, size = 0x2000, scoped, tag = 'input window, operand 2']
    #allocation6 [shape = 's32[2]{0}', space=sflag, size = 0x8, scoped, tag = 'scoped memory for tpu_custom_call.1']
    #allocation7 [shape = 'u8[16384]{0}', space=vmem, size = 0x4000, scoped, tag = 'input window, operand 3, single buffered']
    #allocation8 [shape = 'u8[8192]{0}', space=vmem, size = 0x2000, scoped, tag = 'output window, operand 0']
    %11 = vsyncpa [#allocation3], 0
    %s12 = scalar_lea.sflag [#allocation3], 1
    %13 = vsyncpa %s12, 0
    %14 = vsyncpa [#allocation6], 0
    %s15 = scalar_lea.sflag [#allocation6], 1
    %16 = vsyncpa %s15, 0
    %17 = vsyncpa [#allocation4], 0
    %s18 = scalar_lea.sflag [#allocation4], 1
    %19 = vsyncpa %s18, 0
    loop: start=0, step=1, limit=4
    $region2: #{tpu_custom_call.1} parent=1 // loop_pre_header
      _
    $region3: #{tpu_custom_call.1} parent=1 // loop_header
      %s21 = sphi 0, %s25
      %p22 = scmp.ge.s32.totalorder %s21, 4
      %s31 = sphi 0, %s33
      %s34 = sphi 0, %s31
      %s35 = sphi 0, %s34
      %s51 = sphi 0, %s35
      %s57 = sphi 0, %s59
      %s60 = sphi 0, %s57
      %s61 = sphi 0, %s60
      %s77 = sphi 0, %s61
      %s83 = sphi 0, %s85
      %s86 = sphi 0, %s83
      %s87 = sphi 0, %s86
      %s103 = sphi 0, %s87
      %s107 = sphi 0, %s107
      %s109 = sphi 0, %s107
      %s110 = sphi 0, %s109
      %s124 = sphi 0, %s110
      %s128 = sphi 0, %s128
      %s130 = sphi 0, %s128
      %s131 = sphi 0, %s130
      %s145 = sphi 0, %s131
      %s149 = sphi 0, %s149
      %s151 = sphi 0, %s149
      %s152 = sphi 0, %s151
      %s166 = sphi 0, %s152
      %s172 = sphi 0, %s174
      %s175 = sphi 0, %s172
      %s176 = sphi 0, %s175
      %s192 = sphi 0, %s176
    $region4: #{tpu_custom_call.1} parent=1 // loop_header_branch
      %24 = sbr.rel (%p22) target = $region8
    $region5: #{tpu_custom_call.1} parent=1 // loop_body
      %s26 = ssub.s32 %s21, 1
      %s27 = ssub.s32 %s21, 2
      %s28 = sadd.s32 %s21, 1
      %s29 = ssub.s32 %s21, %s28
      %p30 = scmp.eq.s32.totalorder %s29, 0
      %s32 = sadd.s32 %s31, 1
      %s33 = scalar_select %p30, %s31, %s32
      %p36 = pneg %p30
      %p37 = scmp.eq.s32.totalorder %s21, 1
      %p38 = por %p36, %p37
      %p39 = scmp.ne.s32.totalorder %s31, %s34
      %p40 = scmp.eq.s32.totalorder %s21, 0
      %p41 = por %p39, %p40
      %p42 = scmp.ne.s32.totalorder %s31, %s34
      %p43 = scmp.eq.s32.totalorder %s26, 1
      %p44 = por %p42, %p43
      %p45 = scmp.ne.s32.totalorder %s34, %s35
      %p46 = scmp.eq.s32.totalorder %s26, 0
      %p47 = por %p45, %p46
      %p48 = scmp.ne.s32.totalorder %s34, %s35
      %p49 = scmp.eq.s32.totalorder %s27, 1
      %p50 = por %p48, %p49
      %p52 = scmp.ne.s32.totalorder %s35, %s51
      %p53 = scmp.eq.s32.totalorder %s27, 0
      %p54 = por %p52, %p53
      %s55 = ssub.s32 %s21, %s28
      %p56 = scmp.eq.s32.totalorder %s55, 0
      %s58 = sadd.s32 %s57, 1
      %s59 = scalar_select %p56, %s57, %s58
      %p62 = pneg %p56
      %p63 = scmp.eq.s32.totalorder %s21, 1
      %p64 = por %p62, %p63
      %p65 = scmp.ne.s32.totalorder %s57, %s60
      %p66 = scmp.eq.s32.totalorder %s21, 0
      %p67 = por %p65, %p66
      %p68 = scmp.ne.s32.totalorder %s57, %s60
      %p69 = scmp.eq.s32.totalorder %s26, 1
      %p70 = por %p68, %p69
      %p71 = scmp.ne.s32.totalorder %s60, %s61
      %p72 = scmp.eq.s32.totalorder %s26, 0
      %p73 = por %p71, %p72
      %p74 = scmp.ne.s32.totalorder %s60, %s61
      %p75 = scmp.eq.s32.totalorder %s27, 1
      %p76 = por %p74, %p75
      %p78 = scmp.ne.s32.totalorder %s61, %s77
      %p79 = scmp.eq.s32.totalorder %s27, 0
      %p80 = por %p78, %p79
      %s81 = ssub.s32 %s21, %s28
      %p82 = scmp.eq.s32.totalorder %s81, 0
      %s84 = sadd.s32 %s83, 1
      %s85 = scalar_select %p82, %s83, %s84
      %p88 = pneg %p82
      %p89 = scmp.eq.s32.totalorder %s21, 1
      %p90 = por %p88, %p89
      %p91 = scmp.ne.s32.totalorder %s83, %s86
      %p92 = scmp.eq.s32.totalorder %s21, 0
      %p93 = por %p91, %p92
      %p94 = scmp.ne.s32.totalorder %s83, %s86
      %p95 = scmp.eq.s32.totalorder %s26, 1
      %p96 = por %p94, %p95
      %p97 = scmp.ne.s32.totalorder %s86, %s87
      %p98 = scmp.eq.s32.totalorder %s26, 0
      %p99 = por %p97, %p98
      %p100 = scmp.ne.s32.totalorder %s86, %s87
      %p101 = scmp.eq.s32.totalorder %s27, 1
      %p102 = por %p100, %p101
      %p104 = scmp.ne.s32.totalorder %s87, %s103
      %p105 = scmp.eq.s32.totalorder %s27, 0
      %p106 = por %p104, %p105
      %s108 = sadd.s32 %s107, 1
      %p111 = scmp.eq.s32.totalorder %s21, 1
      %p112 = scmp.ne.s32.totalorder %s107, %s109
      %p113 = scmp.eq.s32.totalorder %s21, 0
      %p114 = por %p112, %p113
      %p115 = scmp.ne.s32.totalorder %s107, %s109
      %p116 = scmp.eq.s32.totalorder %s26, 1
      %p117 = por %p115, %p116
      %p118 = scmp.ne.s32.totalorder %s109, %s110
      %p119 = scmp.eq.s32.totalorder %s26, 0
      %p120 = por %p118, %p119
      %p121 = scmp.ne.s32.totalorder %s109, %s110
      %p122 = scmp.eq.s32.totalorder %s27, 1
      %p123 = por %p121, %p122
      %p125 = scmp.ne.s32.totalorder %s110, %s124
      %p126 = scmp.eq.s32.totalorder %s27, 0
      %p127 = por %p125, %p126
      %s129 = sadd.s32 %s128, 1
      %p132 = scmp.eq.s32.totalorder %s21, 1
      %p133 = scmp.ne.s32.totalorder %s128, %s130
      %p134 = scmp.eq.s32.totalorder %s21, 0
      %p135 = por %p133, %p134
      %p136 = scmp.ne.s32.totalorder %s128, %s130
      %p137 = scmp.eq.s32.totalorder %s26, 1
      %p138 = por %p136, %p137
      %p139 = scmp.ne.s32.totalorder %s130, %s131
      %p140 = scmp.eq.s32.totalorder %s26, 0
      %p141 = por %p139, %p140
      %p142 = scmp.ne.s32.totalorder %s130, %s131
      %p143 = scmp.eq.s32.totalorder %s27, 1
      %p144 = por %p142, %p143
      %p146 = scmp.ne.s32.totalorder %s131, %s145
      %p147 = scmp.eq.s32.totalorder %s27, 0
      %p148 = por %p146, %p147
      %s150 = sadd.s32 %s149, 1
      %p153 = scmp.eq.s32.totalorder %s21, 1
      %p154 = scmp.ne.s32.totalorder %s149, %s151
      %p155 = scmp.eq.s32.totalorder %s21, 0
      %p156 = por %p154, %p155
      %p157 = scmp.ne.s32.totalorder %s149, %s151
      %p158 = scmp.eq.s32.totalorder %s26, 1
      %p159 = por %p157, %p158
      %p160 = scmp.ne.s32.totalorder %s151, %s152
      %p161 = scmp.eq.s32.totalorder %s26, 0
      %p162 = por %p160, %p161
      %p163 = scmp.ne.s32.totalorder %s151, %s152
      %p164 = scmp.eq.s32.totalorder %s27, 1
      %p165 = por %p163, %p164
      %p167 = scmp.ne.s32.totalorder %s152, %s166
      %p168 = scmp.eq.s32.totalorder %s27, 0
      %p169 = por %p167, %p168
      %s170 = ssub.s32 %s21, %s28
      %p171 = scmp.eq.s32.totalorder %s170, 0
      %s173 = sadd.s32 %s172, 1
      %s174 = scalar_select %p171, %s172, %s173
      %p177 = pneg %p171
      %p178 = scmp.eq.s32.totalorder %s21, 1
      %p179 = por %p177, %p178
      %p180 = scmp.ne.s32.totalorder %s172, %s175
      %p181 = scmp.eq.s32.totalorder %s21, 0
      %p182 = por %p180, %p181
      %p183 = scmp.ne.s32.totalorder %s172, %s175
      %p184 = scmp.eq.s32.totalorder %s26, 1
      %p185 = por %p183, %p184
      %p186 = scmp.ne.s32.totalorder %s175, %s176
      %p187 = scmp.eq.s32.totalorder %s26, 0
      %p188 = por %p186, %p187
      %p189 = scmp.ne.s32.totalorder %s175, %s176
      %p190 = scmp.eq.s32.totalorder %s27, 1
      %p191 = por %p189, %p190
      %p193 = scmp.ne.s32.totalorder %s176, %s192
      %p194 = scmp.eq.s32.totalorder %s27, 0
      %p195 = por %p193, %p194
      %p196 = scmp.le.s32.totalorder 1, %s21
      %p197 = scmp.lt.s32.totalorder %s21, 3
      %p198 = pnand %p196, %p197
      %p199 = pneg %p198
      // Predicated region
      $region9: #{tpu_custom_call.1} parent=5 // pred_check
        _
      $region10: #{tpu_custom_call.1} parent=5 // pred_check_branch
        %201 = sbr.rel (%p198) target = $region12
      $region11: #{tpu_custom_call.1} parent=5 // pred_region
        %s202 = ssub.s32 %s21, 1
        // Predicated region
        $region13: #{tpu_custom_call.1} parent=11 // pred_check
          %p203 = pneg %p120
        $region14: #{tpu_custom_call.1} parent=11 // pred_check_branch
          %205 = sbr.rel (%p203) target = $region16
        $region15: #{tpu_custom_call.1} parent=11 // pred_region
          %s207 = ssub.s32 512, 512
          %208 = vsyncadd [#allocation6], %s207
          %s209 = sshll.u32 [#allocation7], 4
          %s210 = int_to_ptr.vmem [resolvable:$true] %s209
          %215 = dma.hbm_to_vmem [thread:$0]  %s3, 512, %s210, [#allocation6], 128, 128, 8
        $region16: #{tpu_custom_call.1} parent=11 // pred_fallthru
          _
        // Predicated region
        $region17: #{tpu_custom_call.1} parent=11 // pred_check
          %p216 = pneg %p141
        $region18: #{tpu_custom_call.1} parent=11 // pred_check_branch
          %218 = sbr.rel (%p216) target = $region20
        $region19: #{tpu_custom_call.1} parent=11 // pred_region
          _
        $region20: #{tpu_custom_call.1} parent=11 // pred_fallthru
          _
        // Predicated region
        $region21: #{tpu_custom_call.1} parent=11 // pred_check
          %p219 = pneg %p162
        $region22: #{tpu_custom_call.1} parent=11 // pred_check_branch
          %221 = sbr.rel (%p219) target = $region24
        $region23: #{tpu_custom_call.1} parent=11 // pred_region
          _
        $region24: #{tpu_custom_call.1} parent=11 // pred_fallthru
          _
      $region12: #{tpu_custom_call.1} parent=5 // pred_fallthru
        _
      %p222 = scmp.lt.s32.totalorder %s21, 2
      // Predicated region
      $region25: #{tpu_custom_call.1} parent=5 // pred_check
        %p223 = pneg %p222
      $region26: #{tpu_custom_call.1} parent=5 // pred_check_branch
        %225 = sbr.rel (%p223) target = $region28
      $region27: #{tpu_custom_call.1} parent=5 // pred_region
        // Predicated region
        $region29: #{tpu_custom_call.1} parent=27 // pred_check
          %p226 = pneg %p41
        $region30: #{tpu_custom_call.1} parent=27 // pred_check_branch
          %228 = sbr.rel (%p226) target = $region32
        $region31: #{tpu_custom_call.1} parent=27 // pred_region
          %s229 = sand.u32 %s31, 1
          %s230 = scalar_lea.sflag [#allocation3], %s229
          %s231 = sand.u32 %s31, 1
          %s232 = smul.addr %s231, 8
          %s233 = scalar_lea.vmem [#allocation2], %s232
          %s235 = ssub.s32 128, 128
          %236 = vsyncadd %s230, %s235
          %s237 = smul.addr %s21, 128
          %s238 = scalar_lea.hbm %s0, %s237
          %s240 = sshll.u32 %s233, 4
          %s241 = int_to_ptr.vmem [resolvable:$true] %s240
          %243 = dma.hbm_to_vmem [thread:$0]  %s238, 128, %s241, %s230
        $region32: #{tpu_custom_call.1} parent=27 // pred_fallthru
          _
        // Predicated region
        $region33: #{tpu_custom_call.1} parent=27 // pred_check
          %p244 = pneg %p67
        $region34: #{tpu_custom_call.1} parent=27 // pred_check_branch
          %246 = sbr.rel (%p244) target = $region36
        $region35: #{tpu_custom_call.1} parent=27 // pred_region
          %p247 = scmp.lt.s32.totalorder %s21, 1
          %s248 = scalar_select %p247, %s21, 1
          %s249 = smul.addr %s248, 8
          %s250 = scalar_lea.vmem %s1, %s249
        $region36: #{tpu_custom_call.1} parent=27 // pred_fallthru
          _
        // Predicated region
        $region37: #{tpu_custom_call.1} parent=27 // pred_check
          %p251 = pneg %p93
        $region38: #{tpu_custom_call.1} parent=27 // pred_check_branch
          %253 = sbr.rel (%p251) target = $region40
        $region39: #{tpu_custom_call.1} parent=27 // pred_region
          %s254 = sand.u32 %s21, 1
          %s255 = scalar_lea.sflag [#allocation6], %s254
          %s256 = sand.u32 %s83, 1
          %s257 = smul.addr %s256, 8
          %s258 = scalar_lea.vmem [#allocation5], %s257
          %s260 = ssub.s32 128, 128
          %261 = vsyncadd %s255, %s260
          %s262 = smul.addr %s21, 128
          %s263 = scalar_lea.hbm %s2, %s262
          %s265 = sshll.u32 %s258, 4
          %s266 = int_to_ptr.vmem [resolvable:$true] %s265
          %268 = dma.hbm_to_vmem [thread:$0]  %s263, 128, %s266, %s255
        $region40: #{tpu_custom_call.1} parent=27 // pred_fallthru
          _
      $region28: #{tpu_custom_call.1} parent=5 // pred_fallthru
        _
      %p269 = scmp.le.s32.totalorder 1, %s21
      %p270 = scmp.lt.s32.totalorder %s21, 3
      %p271 = pnand %p269, %p270
      %p272 = pneg %p271
      // Predicated region
      $region41: #{tpu_custom_call.1} parent=5 // pred_check
        _
      $region42: #{tpu_custom_call.1} parent=5 // pred_check_branch
        %274 = sbr.rel (%p271) target = $region44
      $region43: #{tpu_custom_call.1} parent=5 // pred_region
        %s275 = ssub.s32 %s21, 1
        %s276 = sand.u32 %s34, 1
        %s277 = scalar_lea.sflag [#allocation3], %s276
        %s278 = sand.u32 %s34, 1
        %s279 = smul.addr %s278, 8
        %s280 = scalar_lea.vmem [#allocation2], %s279
        // Predicated region
        $region45: #{tpu_custom_call.1} parent=43 // pred_check
          %p281 = pneg %p47
        $region46: #{tpu_custom_call.1} parent=43 // pred_check_branch
          %283 = sbr.rel (%p281) target = $region48
        $region47: #{tpu_custom_call.1} parent=43 // pred_region
          %284 = dma.done %s277, 128
        $region48: #{tpu_custom_call.1} parent=43 // pred_fallthru
          _
        %s285 = sand.u32 %s26, 1
        %s286 = scalar_lea.sflag [#allocation6], %s285
        %s287 = sand.u32 %s86, 1
        %s288 = smul.addr %s287, 8
        %s289 = scalar_lea.vmem [#allocation5], %s288
        // Predicated region
        $region49: #{tpu_custom_call.1} parent=43 // pred_check
          %p290 = pneg %p99
        $region50: #{tpu_custom_call.1} parent=43 // pred_check_branch
          %292 = sbr.rel (%p290) target = $region52
        $region51: #{tpu_custom_call.1} parent=43 // pred_region
          %293 = dma.done %s286, 128
        $region52: #{tpu_custom_call.1} parent=43 // pred_fallthru
          _
        // Predicated region
        $region53: #{tpu_custom_call.1} parent=43 // pred_check
          %p294 = pneg %p120
        $region54: #{tpu_custom_call.1} parent=43 // pred_check_branch
          %296 = sbr.rel (%p294) target = $region56
        $region55: #{tpu_custom_call.1} parent=43 // pred_region
          %297 = dma.done [#allocation6], 512
        $region56: #{tpu_custom_call.1} parent=43 // pred_fallthru
          _
        %s298 = sand.u32 %s34, 1
        %s299 = scalar_lea.sflag [#allocation3], %s298
        %s300 = sand.u32 %s34, 1
        %s301 = smul.addr %s300, 8
        %s302 = scalar_lea.vmem [#allocation2], %s301
        %p303 = pneg %p47
        %p304 = pneg %p44
        %p305 = scmp.lt.s32.totalorder %s26, 1
        %s306 = scalar_select %p305, %s26, 1
        %s307 = smul.addr %s306, 8
        %s308 = scalar_lea.vmem %s1, %s307
        %p309 = pneg %p73
        %p310 = pneg %p70
        %s311 = sand.u32 %s26, 1
        %s312 = scalar_lea.sflag [#allocation6], %s311
        %s313 = sand.u32 %s86, 1
        %s314 = smul.addr %s313, 8
        %s315 = scalar_lea.vmem [#allocation5], %s314
        %p316 = pneg %p99
        %p317 = pneg %p96
        %p318 = pneg %p120
        %p319 = pneg %p117
        %p320 = pneg %p141
        %p321 = pneg %p138
        %p322 = pneg %p162
        %p323 = pneg %p159
        %p324 = pneg %p188
        %p325 = pneg %p185
        %s326 = sand.u32 %s175, 1
        %s327 = scalar_lea.sflag [#allocation4], %s326
        %s328 = sand.u32 %s175, 1
        %s329 = smul.addr %s328, 8
        %s330 = scalar_lea.vmem [#allocation8], %s329
        %p331 = scmp.lt.s32.totalorder %s26, 1
        %s332 = scalar_select %p331, %s26, 1
        %s333 = smul.addr %s332, 8
        %s334 = scalar_lea.vmem %s1, %s333
        %v335 = vld [vmem:[%s280] sm:$0xff]
        %v336 = vld [vmem:[%s289] sm:$0xff]
        %337 = vxpose.xlu0.b32.start [1/16] %v335, 128
        %338 = vxpose.xlu0.b32.cont [2/16] 0.0, 128
        %339 = vxpose.xlu0.b32.cont [3/16] 0.0, 128
        %340 = vxpose.xlu0.b32.cont [4/16] 0.0, 128
        %341 = vxpose.xlu0.b32.cont [5/16] 0.0, 128
        %342 = vxpose.xlu0.b32.cont [6/16] 0.0, 128
        %343 = vxpose.xlu0.b32.cont [7/16] 0.0, 128
        %344 = vxpose.xlu0.b32.cont [8/16] 0.0, 128
        %345 = vxpose.xlu0.b32.cont [9/16] 0.0, 128
        %346 = vxpose.xlu0.b32.cont [10/16] 0.0, 128
        %347 = vxpose.xlu0.b32.cont [11/16] 0.0, 128
        %348 = vxpose.xlu0.b32.cont [12/16] 0.0, 128
        %349 = vxpose.xlu0.b32.cont [13/16] 0.0, 128
        %350 = vxpose.xlu0.b32.cont [14/16] 0.0, 128
        %351 = vxpose.xlu0.b32.cont [15/16] 0.0, 128
        %352 = vxpose.xlu0.b32.end [16/16] 0.0, 128
        %v353 = vpop.trf.xlu0
        %v354 = vpop.trf.xlu0
        %v355 = vpop.trf.xlu0
        %v356 = vpop.trf.xlu0
        %v357 = vpop.trf.xlu0
        %v358 = vpop.trf.xlu0
        %v359 = vpop.trf.xlu0
        %v360 = vpop.trf.xlu0
        %v361 = vpop.trf.xlu0
        %v362 = vpop.trf.xlu0
        %v363 = vpop.trf.xlu0
        %v364 = vpop.trf.xlu0
        %v365 = vpop.trf.xlu0
        %v366 = vpop.trf.xlu0
        %v367 = vpop.trf.xlu0
        %v368 = vpop.trf.xlu0
        %vm369 = vcmask 64512
        %v371 = vsel %vm369, %v353, 0
        %373 = vmatprep.subr.mxu0 0.0
        %374 = vmatpush1.msra.mxu0 %v336
        %375 = vmatprep.subr.mxu0 0.0
        %376 = vmatpush1.msra.mxu0 0.0
        %377 = vmatprep.subr.mxu0 0.0
        %378 = vmatpush1.msra.mxu0 0.0
        %379 = vmatprep.subr.mxu0 0.0
        %380 = vmatpush1.msra.mxu0 0.0
        %381 = vmatprep.subr.mxu0 0.0
        %382 = vmatpush1.msra.mxu0 0.0
        %383 = vmatprep.subr.mxu0 0.0
        %384 = vmatpush1.msra.mxu0 0.0
        %385 = vmatprep.subr.mxu0 0.0
        %386 = vmatpush1.msra.mxu0 0.0
        %387 = vmatprep.subr.mxu0 0.0
        %388 = vmatpush1.msra.mxu0 0.0
        %389 = vmatprep.subr.mxu0 0.0
        %390 = vmatpush1.msra.mxu0 0.0
        %391 = vmatprep.subr.mxu0 0.0
        %392 = vmatpush1.msra.mxu0 0.0
        %393 = vmatprep.subr.mxu0 0.0
        %394 = vmatpush1.msra.mxu0 0.0
        %395 = vmatprep.subr.mxu0 0.0
        %396 = vmatpush1.msra.mxu0 0.0
        %397 = vmatprep.subr.mxu0 0.0
        %398 = vmatpush1.msra.mxu0 0.0
        %399 = vmatprep.subr.mxu0 0.0
        %400 = vmatpush1.msra.mxu0 0.0
        %401 = vmatprep.subr.mxu0 0.0
        %402 = vmatpush1.msra.mxu0 0.0
        %403 = vmatprep.subr.mxu0 0.0
        %404 = vmatpush1.msra.mxu0 0.0
        %405 = vmatprep.subr.mxu0 0.0
        %406 = vmatpush1.msra.mxu0 0.0
        %407 = vmatprep.subr.mxu0 0.0
        %408 = vmatpush1.msra.mxu0 0.0
        %409 = vmatprep.subr.mxu0 0.0
        %410 = vmatpush1.msra.mxu0 0.0
        %411 = vmatprep.subr.mxu0 0.0
        %412 = vmatpush1.msra.mxu0 0.0
        %413 = vmatprep.subr.mxu0 0.0
        %414 = vmatpush1.msra.mxu0 0.0
        %415 = vmatprep.subr.mxu0 0.0
        %416 = vmatpush1.msra.mxu0 0.0
        %417 = vmatprep.subr.mxu0 0.0
        %418 = vmatpush1.msra.mxu0 0.0
        %419 = vmatprep.subr.mxu0 0.0
        %420 = vmatpush1.msra.mxu0 0.0
        %421 = vmatprep.subr.mxu0 0.0
        %422 = vmatpush1.msra.mxu0 0.0
        %423 = vmatprep.subr.mxu0 0.0
        %424 = vmatpush1.msra.mxu0 0.0
        %425 = vmatprep.subr.mxu0 0.0
        %426 = vmatpush1.msra.mxu0 0.0
        %427 = vmatprep.subr.mxu0 0.0
        %428 = vmatpush1.msra.mxu0 0.0
        %429 = vmatprep.subr.mxu0 0.0
        %430 = vmatpush1.msra.mxu0 0.0
        %431 = vmatprep.subr.mxu0 0.0
        %432 = vmatpush1.msra.mxu0 0.0
        %433 = vmatprep.subr.mxu0 0.0
        %434 = vmatpush1.msra.mxu0 0.0
        %435 = vmatprep.subr.mxu0 0.0
        %436 = vmatpush1.msra.mxu0 0.0
        %437 = vmatprep.mubr.f32.mxu0 0.0
        %438 = vmatmul.mubr.f32.gmra.mrb[0].mxu0 %v371
        %v439 = vpop.f32.mrb[0].mxu0
        %v440 = vadd.f32 0.0, %v439
        %v441 = vpop.f32.mrb[0].mxu0
        %442 = vdwg.mxu0
        %v443 = vld [vmem:[%s334] sm:$0xff]
        %445 = vset.pattern.permute.xlu0 0
        %446 = vperm.xlu0 %445, %v443
        %v447 = vpop.permute.xlu0 %446
        %v449 = vmul.f32 %v440, %v447
        %v450 = vld [vmem:[#allocation7] sm:$0xff]
        %v451 = vld [vmem:[#allocation7 + $0x8] sm:$0xff]
        %v452 = vld [vmem:[#allocation7 + $0x10] sm:$0xff]
        %v453 = vld [vmem:[#allocation7 + $0x18] sm:$0xff]
        %v454 = vld [vmem:[%s4] sm:$0xff]
        %v455 = vld [vmem:[%s4 + $0x8] sm:$0xff]
        %v456 = vld [vmem:[%s4 + $0x10] sm:$0xff]
        %v457 = vld [vmem:[%s4 + $0x18] sm:$0xff]
        %vm458 = vcmask 261120
        %v460 = vsel %vm458, %v449, 0
        %462 = vmatprep.subr.mxu0 0.0
        %463 = vmatpush1.msra.mxu0 %v454
        %464 = vmatprep.subr.mxu0 0.0
        %465 = vmatpush1.msra.mxu0 %v455
        %466 = vmatprep.subr.mxu0 0.0
        %467 = vmatpush1.msra.mxu0 %v456
        %468 = vmatprep.subr.mxu0 0.0
        %469 = vmatpush1.msra.mxu0 %v457
        %470 = vmatprep.subr.mxu0 0.0
        %471 = vmatpush1.msra.mxu0 0.0
        %472 = vmatprep.subr.mxu0 0.0
        %473 = vmatpush1.msra.mxu0 0.0
        %474 = vmatprep.subr.mxu0 0.0
        %475 = vmatpush1.msra.mxu0 0.0
        %476 = vmatprep.subr.mxu0 0.0
        %477 = vmatpush1.msra.mxu0 0.0
        %478 = vmatprep.subr.mxu0 0.0
        %479 = vmatpush1.msra.mxu0 0.0
        %480 = vmatprep.subr.mxu0 0.0
        %481 = vmatpush1.msra.mxu0 0.0
        %482 = vmatprep.subr.mxu0 0.0
        %483 = vmatpush1.msra.mxu0 0.0
        %484 = vmatprep.subr.mxu0 0.0
        %485 = vmatpush1.msra.mxu0 0.0
        %486 = vmatprep.subr.mxu0 0.0
        %487 = vmatpush1.msra.mxu0 0.0
        %488 = vmatprep.subr.mxu0 0.0
        %489 = vmatpush1.msra.mxu0 0.0
        %490 = vmatprep.subr.mxu0 0.0
        %491 = vmatpush1.msra.mxu0 0.0
        %492 = vmatprep.subr.mxu0 0.0
        %493 = vmatpush1.msra.mxu0 0.0
        %494 = vmatprep.subr.mxu0 0.0
        %495 = vmatpush1.msra.mxu0 0.0
        %496 = vmatprep.subr.mxu0 0.0
        %497 = vmatpush1.msra.mxu0 0.0
        %498 = vmatprep.subr.mxu0 0.0
        %499 = vmatpush1.msra.mxu0 0.0
        %500 = vmatprep.subr.mxu0 0.0
        %501 = vmatpush1.msra.mxu0 0.0
        %502 = vmatprep.subr.mxu0 0.0
        %503 = vmatpush1.msra.mxu0 0.0
        %504 = vmatprep.subr.mxu0 0.0
        %505 = vmatpush1.msra.mxu0 0.0
        %506 = vmatprep.subr.mxu0 0.0
        %507 = vmatpush1.msra.mxu0 0.0
        %508 = vmatprep.subr.mxu0 0.0
        %509 = vmatpush1.msra.mxu0 0.0
        %510 = vmatprep.subr.mxu0 0.0
        %511 = vmatpush1.msra.mxu0 0.0
        %512 = vmatprep.subr.mxu0 0.0
        %513 = vmatpush1.msra.mxu0 0.0
        %514 = vmatprep.subr.mxu0 0.0
        %515 = vmatpush1.msra.mxu0 0.0
        %516 = vmatprep.subr.mxu0 0.0
        %517 = vmatpush1.msra.mxu0 0.0
        %518 = vmatprep.subr.mxu0 0.0
        %519 = vmatpush1.msra.mxu0 0.0
        %520 = vmatprep.subr.mxu0 0.0
        %521 = vmatpush1.msra.mxu0 0.0
        %522 = vmatprep.subr.mxu0 0.0
        %523 = vmatpush1.msra.mxu0 0.0
        %524 = vmatprep.subr.mxu0 0.0
        %525 = vmatpush1.msra.mxu0 0.0
        %526 = vmatprep.mubr.f32.mxu0 0.0
        %527 = vmatmul.mubr.f32.gmra.mrb[0].mxu0 %v460
        %v528 = vpop.f32.mrb[0].mxu0
        %v529 = vadd.f32 0.0, %v528
        %v530 = vpop.f32.mrb[0].mxu0
        %531 = vdwg.mxu0
        %v533 = vsel %vm458, %v336, 0
        %535 = vmatprep.subr.mxu0 0.0
        %536 = vmatpush1.msra.mxu0 %v450
        %537 = vmatprep.subr.mxu0 0.0
        %538 = vmatpush1.msra.mxu0 %v451
        %539 = vmatprep.subr.mxu0 0.0
        %540 = vmatpush1.msra.mxu0 %v452
        %541 = vmatprep.subr.mxu0 0.0
        %542 = vmatpush1.msra.mxu0 %v453
        %543 = vmatprep.subr.mxu0 0.0
        %544 = vmatpush1.msra.mxu0 0.0
        %545 = vmatprep.subr.mxu0 0.0
        %546 = vmatpush1.msra.mxu0 0.0
        %547 = vmatprep.subr.mxu0 0.0
        %548 = vmatpush1.msra.mxu0 0.0
        %549 = vmatprep.subr.mxu0 0.0
        %550 = vmatpush1.msra.mxu0 0.0
        %551 = vmatprep.subr.mxu0 0.0
        %552 = vmatpush1.msra.mxu0 0.0
        %553 = vmatprep.subr.mxu0 0.0
        %554 = vmatpush1.msra.mxu0 0.0
        %555 = vmatprep.subr.mxu0 0.0
        %556 = vmatpush1.msra.mxu0 0.0
        %557 = vmatprep.subr.mxu0 0.0
        %558 = vmatpush1.msra.mxu0 0.0
        %559 = vmatprep.subr.mxu0 0.0
        %560 = vmatpush1.msra.mxu0 0.0
        %561 = vmatprep.subr.mxu0 0.0
        %562 = vmatpush1.msra.mxu0 0.0
        %563 = vmatprep.subr.mxu0 0.0
        %564 = vmatpush1.msra.mxu0 0.0
        %565 = vmatprep.subr.mxu0 0.0
        %566 = vmatpush1.msra.mxu0 0.0
        %567 = vmatprep.subr.mxu0 0.0
        %568 = vmatpush1.msra.mxu0 0.0
        %569 = vmatprep.subr.mxu0 0.0
        %570 = vmatpush1.msra.mxu0 0.0
        %571 = vmatprep.subr.mxu0 0.0
        %572 = vmatpush1.msra.mxu0 0.0
        %573 = vmatprep.subr.mxu0 0.0
        %574 = vmatpush1.msra.mxu0 0.0
        %575 = vmatprep.subr.mxu0 0.0
        %576 = vmatpush1.msra.mxu0 0.0
        %577 = vmatprep.subr.mxu0 0.0
        %578 = vmatpush1.msra.mxu0 0.0
        %579 = vmatprep.subr.mxu0 0.0
        %580 = vmatpush1.msra.mxu0 0.0
        %581 = vmatprep.subr.mxu0 0.0
        %582 = vmatpush1.msra.mxu0 0.0
        %583 = vmatprep.subr.mxu0 0.0
        %584 = vmatpush1.msra.mxu0 0.0
        %585 = vmatprep.subr.mxu0 0.0
        %586 = vmatpush1.msra.mxu0 0.0
        %587 = vmatprep.subr.mxu0 0.0
        %588 = vmatpush1.msra.mxu0 0.0
        %589 = vmatprep.subr.mxu0 0.0
        %590 = vmatpush1.msra.mxu0 0.0
        %591 = vmatprep.subr.mxu0 0.0
        %592 = vmatpush1.msra.mxu0 0.0
        %593 = vmatprep.subr.mxu0 0.0
        %594 = vmatpush1.msra.mxu0 0.0
        %595 = vmatprep.subr.mxu0 0.0
        %596 = vmatpush1.msra.mxu0 0.0
        %597 = vmatprep.subr.mxu0 0.0
        %598 = vmatpush1.msra.mxu0 0.0
        %599 = vmatprep.mubr.f32.mxu0 0.0
        %600 = vmatmul.mubr.f32.gmra.mrb[0].mxu0 %v533
        %v601 = vpop.f32.mrb[0].mxu0
        %v602 = vadd.f32 %v529, %v601
        %v603 = vpop.f32.mrb[0].mxu0
        %604 = vdwg.mxu0
        %v605 = vld [vmem:[%s5] sm:$0x1]
        %v607 = vlaneseq
        %v608 = vshrl.u32 %v607, 7
        %v609 = vsub.s32 0, %v608
        %v610 = vrot.slane %v605, %v609
        %v612 = vadd.f32 %v602, %v610
        %v613 = vmax.f32 %v612, 0.0
        %614 = vst.msk [vmem:[%s330] sm:$0xff] %vm458, %v613
        %s615 = sand.u32 %s175, 1
        %s616 = scalar_lea.sflag [#allocation4], %s615
        %s617 = sand.u32 %s175, 1
        %s618 = smul.addr %s617, 8
        %s619 = scalar_lea.vmem [#allocation8], %s618
        // Predicated region
        $region57: #{tpu_custom_call.1} parent=43 // pred_check
          %p620 = pneg %p185
        $region58: #{tpu_custom_call.1} parent=43 // pred_check_branch
          %622 = sbr.rel (%p620) target = $region60
        $region59: #{tpu_custom_call.1} parent=43 // pred_region
          %s624 = ssub.s32 128, 128
          %625 = vsyncadd %s616, %s624
          %s626 = smul.addr %s26, 128
          %s627 = scalar_lea.hbm %s6, %s626
          %s629 = sshll.u32 %s619, 4
          %s630 = int_to_ptr.vmem [resolvable:$true] %s629
          %632 = dma.vmem_to_hbm [thread:$0]  %s630, 128, %s627, %s616
        $region60: #{tpu_custom_call.1} parent=43 // pred_fallthru
          _
      $region44: #{tpu_custom_call.1} parent=5 // pred_fallthru
        _
      %p633 = scmp.le.s32.totalorder 2, %s21
      // Predicated region
      $region61: #{tpu_custom_call.1} parent=5 // pred_check
        %p634 = pneg %p633
      $region62: #{tpu_custom_call.1} parent=5 // pred_check_branch
        %636 = sbr.rel (%p634) target = $region64
      $region63: #{tpu_custom_call.1} parent=5 // pred_region
        %s637 = ssub.s32 %s21, 2
        // Predicated region
        $region65: #{tpu_custom_call.1} parent=63 // pred_check
          %p638 = pneg %p191
        $region66: #{tpu_custom_call.1} parent=63 // pred_check_branch
          %640 = sbr.rel (%p638) target = $region68
        $region67: #{tpu_custom_call.1} parent=63 // pred_region
          %s641 = sand.u32 %s176, 1
          %s642 = scalar_lea.sflag [#allocation4], %s641
          %s643 = sand.u32 %s176, 1
          %s644 = smul.addr %s643, 8
          %s645 = scalar_lea.vmem [#allocation8], %s644
          %646 = dma.done %s642, 128
        $region68: #{tpu_custom_call.1} parent=63 // pred_fallthru
          _
      $region64: #{tpu_custom_call.1} parent=5 // pred_fallthru
        _
    $region6: #{tpu_custom_call.1} parent=1 // loop_footer
      %s25 = sadd.s32 1, %s21
    $region7: #{tpu_custom_call.1} parent=1 // loop_footer_branch
      %20 = sbr.rel target = $region3
    $region8: #{tpu_custom_call.1} parent=1 // loop_exit
      _
    %647 = vsyncpa [#allocation3], 1
    %s648 = scalar_lea.sflag [#allocation3], 1
    %649 = vsyncpa %s648, 1
    %650 = vsyncpa [#allocation6], 1
    %s651 = scalar_lea.sflag [#allocation6], 1
    %652 = vsyncpa %s651, 1
    %653 = vsyncpa [#allocation4], 1
    %s654 = scalar_lea.sflag [#allocation4], 1
    %655 = vsyncpa %s654, 1

// kernel: tpu_custom_call.1
$region0: #{tpu_custom_call.1}
  #allocation0 [shape = 'u32[]', space=smem, size = 0x4, offset = 0x4, fixed_abs, tag = 'smem constant byte address 0x4 - core index']
  #allocation1 [shape = 'u32[144,128]{1,0:T(1,128)}', space=vmem, size = 0x12000, scoped, tag = 'internal scratch']
  %s0 = inlined_call_operand.hbm [shape: f32[2,8,8], index: 0, kind: input, shape index: {}]
  %s1 = inlined_call_operand.vmem [shape: f32[2,8,1], index: 1, kind: input, shape index: {}]
  %s2 = inlined_call_operand.hbm [shape: f32[2,8,32], index: 2, kind: input, shape index: {}]
  %s3 = inlined_call_operand.hbm [shape: f32[32,32], index: 3, kind: input, shape index: {}]
  %s4 = inlined_call_operand.vmem [shape: f32[32,32], index: 4, kind: input, shape index: {}]
  %s5 = inlined_call_operand.vmem [shape: f32[1,32], index: 5, kind: input, shape index: {}]
  %s6 = inlined_call_operand.hbm [shape: f32[2,8,32], index: 6, kind: output, shape index: {}]
  %s7 = sld [smem:[#allocation0]]
  $region69: #{tpu_custom_call.1} parent=0
    _
  %s9 = ssub.s32 1, %s7
  %s10 = scalar_select 0, %s9, %s7
  $region1: #{tpu_custom_call.1} parent=0
    #allocation2 [shape = 'u8[8192]{0}', space=vmem, size = 0x2000, scoped, tag = 'input window, operand 0']
    #allocation3 [shape = 's32[2]{0}', space=sflag, size = 0x8, scoped, tag = 'scoped memory for tpu_custom_call.1']
    #allocation4 [shape = 's32[2]{0}', space=sflag, size = 0x8, scoped, tag = 'scoped memory for tpu_custom_call.1']
    #allocation5 [shape = 'u8[8192]{0}', space=vmem, size = 0x2000, scoped, tag = 'input window, operand 2']
    #allocation6 [shape = 's32[2]{0}', space=sflag, size = 0x8, scoped, tag = 'scoped memory for tpu_custom_call.1']
    #allocation7 [shape = 'u8[16384]{0}', space=vmem, size = 0x4000, scoped, tag = 'input window, operand 3, single buffered']
    #allocation8 [shape = 'u8[8192]{0}', space=vmem, size = 0x2000, scoped, tag = 'output window, operand 0']
    %11 = vsyncpa [#allocation3], 0
    %s12 = scalar_lea.sflag [#allocation3], 1
    %13 = vsyncpa %s12, 0
    %14 = vsyncpa [#allocation6], 0
    %s15 = scalar_lea.sflag [#allocation6], 1
    %16 = vsyncpa %s15, 0
    %17 = vsyncpa [#allocation4], 0
    %s18 = scalar_lea.sflag [#allocation4], 1
    %19 = vsyncpa %s18, 0
    loop: start=0, step=1, limit=4
    $region2: #{tpu_custom_call.1} parent=1 // loop_pre_header
      _
    $region3: #{tpu_custom_call.1} parent=1 // loop_header
      %s21 = sphi 0, %s25
      %p22 = scmp.ge.s32.totalorder %s21, 4
      %s31 = sphi 0, %s33
      %s34 = sphi 0, %s31
      %s35 = sphi 0, %s34
      %s51 = sphi 0, %s35
      %s57 = sphi 0, %s59
      %s60 = sphi 0, %s57
      %s61 = sphi 0, %s60
      %s77 = sphi 0, %s61
      %s83 = sphi 0, %s85
      %s86 = sphi 0, %s83
      %s87 = sphi 0, %s86
      %s103 = sphi 0, %s87
      %s107 = sphi 0, %s107
      %s109 = sphi 0, %s107
      %s110 = sphi 0, %s109
      %s124 = sphi 0, %s110
      %s128 = sphi 0, %s128
      %s130 = sphi 0, %s128
      %s131 = sphi 0, %s130
      %s145 = sphi 0, %s131
      %s149 = sphi 0, %s149
      %s151 = sphi 0, %s149
      %s152 = sphi 0, %s151
      %s166 = sphi 0, %s152
      %s172 = sphi 0, %s174
      %s175 = sphi 0, %s172
      %s176 = sphi 0, %s175
      %s192 = sphi 0, %s176
    $region4: #{tpu_custom_call.1} parent=1 // loop_header_branch
      %24 = sbr.rel (%p22) target = $region8
    $region5: #{tpu_custom_call.1} parent=1 // loop_body
      %s26 = ssub.s32 %s21, 1
      %s27 = ssub.s32 %s21, 2
      %s28 = sadd.s32 %s21, 1
      %s29 = ssub.s32 %s21, %s28
      %p30 = scmp.eq.s32.totalorder %s29, 0
      %s32 = sadd.s32 %s31, 1
      %s33 = scalar_select %p30, %s31, %s32
      %p36 = pneg %p30
      %p37 = scmp.eq.s32.totalorder %s21, 1
      %p38 = por %p36, %p37
      %p39 = scmp.ne.s32.totalorder %s31, %s34
      %p40 = scmp.eq.s32.totalorder %s21, 0
      %p41 = por %p39, %p40
      %p42 = scmp.ne.s32.totalorder %s31, %s34
      %p43 = scmp.eq.s32.totalorder %s26, 1
      %p44 = por %p42, %p43
      %p45 = scmp.ne.s32.totalorder %s34, %s35
      %p46 = scmp.eq.s32.totalorder %s26, 0
      %p47 = por %p45, %p46
      %p48 = scmp.ne.s32.totalorder %s34, %s35
      %p49 = scmp.eq.s32.totalorder %s27, 1
      %p50 = por %p48, %p49
      %p52 = scmp.ne.s32.totalorder %s35, %s51
      %p53 = scmp.eq.s32.totalorder %s27, 0
      %p54 = por %p52, %p53
      %s55 = ssub.s32 %s21, %s28
      %p56 = scmp.eq.s32.totalorder %s55, 0
      %s58 = sadd.s32 %s57, 1
      %s59 = scalar_select %p56, %s57, %s58
      %p62 = pneg %p56
      %p63 = scmp.eq.s32.totalorder %s21, 1
      %p64 = por %p62, %p63
      %p65 = scmp.ne.s32.totalorder %s57, %s60
      %p66 = scmp.eq.s32.totalorder %s21, 0
      %p67 = por %p65, %p66
      %p68 = scmp.ne.s32.totalorder %s57, %s60
      %p69 = scmp.eq.s32.totalorder %s26, 1
      %p70 = por %p68, %p69
      %p71 = scmp.ne.s32.totalorder %s60, %s61
      %p72 = scmp.eq.s32.totalorder %s26, 0
      %p73 = por %p71, %p72
      %p74 = scmp.ne.s32.totalorder %s60, %s61
      %p75 = scmp.eq.s32.totalorder %s27, 1
      %p76 = por %p74, %p75
      %p78 = scmp.ne.s32.totalorder %s61, %s77
      %p79 = scmp.eq.s32.totalorder %s27, 0
      %p80 = por %p78, %p79
      %s81 = ssub.s32 %s21, %s28
      %p82 = scmp.eq.s32.totalorder %s81, 0
      %s84 = sadd.s32 %s83, 1
      %s85 = scalar_select %p82, %s83, %s84
      %p88 = pneg %p82
      %p89 = scmp.eq.s32.totalorder %s21, 1
      %p90 = por %p88, %p89
      %p91 = scmp.ne.s32.totalorder %s83, %s86
      %p92 = scmp.eq.s32.totalorder %s21, 0
      %p93 = por %p91, %p92
      %p94 = scmp.ne.s32.totalorder %s83, %s86
      %p95 = scmp.eq.s32.totalorder %s26, 1
      %p96 = por %p94, %p95
      %p97 = scmp.ne.s32.totalorder %s86, %s87
      %p98 = scmp.eq.s32.totalorder %s26, 0
      %p99 = por %p97, %p98
      %p100 = scmp.ne.s32.totalorder %s86, %s87
      %p101 = scmp.eq.s32.totalorder %s27, 1
      %p102 = por %p100, %p101
      %p104 = scmp.ne.s32.totalorder %s87, %s103
      %p105 = scmp.eq.s32.totalorder %s27, 0
      %p106 = por %p104, %p105
      %s108 = sadd.s32 %s107, 1
      %p111 = scmp.eq.s32.totalorder %s21, 1
      %p112 = scmp.ne.s32.totalorder %s107, %s109
      %p113 = scmp.eq.s32.totalorder %s21, 0
      %p114 = por %p112, %p113
      %p115 = scmp.ne.s32.totalorder %s107, %s109
      %p116 = scmp.eq.s32.totalorder %s26, 1
      %p117 = por %p115, %p116
      %p118 = scmp.ne.s32.totalorder %s109, %s110
      %p119 = scmp.eq.s32.totalorder %s26, 0
      %p120 = por %p118, %p119
      %p121 = scmp.ne.s32.totalorder %s109, %s110
      %p122 = scmp.eq.s32.totalorder %s27, 1
      %p123 = por %p121, %p122
      %p125 = scmp.ne.s32.totalorder %s110, %s124
      %p126 = scmp.eq.s32.totalorder %s27, 0
      %p127 = por %p125, %p126
      %s129 = sadd.s32 %s128, 1
      %p132 = scmp.eq.s32.totalorder %s21, 1
      %p133 = scmp.ne.s32.totalorder %s128, %s130
      %p134 = scmp.eq.s32.totalorder %s21, 0
      %p135 = por %p133, %p134
      %p136 = scmp.ne.s32.totalorder %s128, %s130
      %p137 = scmp.eq.s32.totalorder %s26, 1
      %p138 = por %p136, %p137
      %p139 = scmp.ne.s32.totalorder %s130, %s131
      %p140 = scmp.eq.s32.totalorder %s26, 0
      %p141 = por %p139, %p140
      %p142 = scmp.ne.s32.totalorder %s130, %s131
      %p143 = scmp.eq.s32.totalorder %s27, 1
      %p144 = por %p142, %p143
      %p146 = scmp.ne.s32.totalorder %s131, %s145
      %p147 = scmp.eq.s32.totalorder %s27, 0
      %p148 = por %p146, %p147
      %s150 = sadd.s32 %s149, 1
      %p153 = scmp.eq.s32.totalorder %s21, 1
      %p154 = scmp.ne.s32.totalorder %s149, %s151
      %p155 = scmp.eq.s32.totalorder %s21, 0
      %p156 = por %p154, %p155
      %p157 = scmp.ne.s32.totalorder %s149, %s151
      %p158 = scmp.eq.s32.totalorder %s26, 1
      %p159 = por %p157, %p158
      %p160 = scmp.ne.s32.totalorder %s151, %s152
      %p161 = scmp.eq.s32.totalorder %s26, 0
      %p162 = por %p160, %p161
      %p163 = scmp.ne.s32.totalorder %s151, %s152
      %p164 = scmp.eq.s32.totalorder %s27, 1
      %p165 = por %p163, %p164
      %p167 = scmp.ne.s32.totalorder %s152, %s166
      %p168 = scmp.eq.s32.totalorder %s27, 0
      %p169 = por %p167, %p168
      %s170 = ssub.s32 %s21, %s28
      %p171 = scmp.eq.s32.totalorder %s170, 0
      %s173 = sadd.s32 %s172, 1
      %s174 = scalar_select %p171, %s172, %s173
      %p177 = pneg %p171
      %p178 = scmp.eq.s32.totalorder %s21, 1
      %p179 = por %p177, %p178
      %p180 = scmp.ne.s32.totalorder %s172, %s175
      %p181 = scmp.eq.s32.totalorder %s21, 0
      %p182 = por %p180, %p181
      %p183 = scmp.ne.s32.totalorder %s172, %s175
      %p184 = scmp.eq.s32.totalorder %s26, 1
      %p185 = por %p183, %p184
      %p186 = scmp.ne.s32.totalorder %s175, %s176
      %p187 = scmp.eq.s32.totalorder %s26, 0
      %p188 = por %p186, %p187
      %p189 = scmp.ne.s32.totalorder %s175, %s176
      %p190 = scmp.eq.s32.totalorder %s27, 1
      %p191 = por %p189, %p190
      %p193 = scmp.ne.s32.totalorder %s176, %s192
      %p194 = scmp.eq.s32.totalorder %s27, 0
      %p195 = por %p193, %p194
      %p196 = scmp.le.s32.totalorder 1, %s21
      %p197 = scmp.lt.s32.totalorder %s21, 3
      %p198 = pnand %p196, %p197
      %p199 = pneg %p198
      // Predicated region
      $region9: #{tpu_custom_call.1} parent=5 // pred_check
        _
      $region10: #{tpu_custom_call.1} parent=5 // pred_check_branch
        %201 = sbr.rel (%p198) target = $region12
      $region11: #{tpu_custom_call.1} parent=5 // pred_region
        %s202 = ssub.s32 %s21, 1
        // Predicated region
        $region13: #{tpu_custom_call.1} parent=11 // pred_check
          %p203 = pneg %p120
        $region14: #{tpu_custom_call.1} parent=11 // pred_check_branch
          %205 = sbr.rel (%p203) target = $region16
        $region15: #{tpu_custom_call.1} parent=11 // pred_region
          %s207 = ssub.s32 512, 512
          %208 = vsyncadd [#allocation6], %s207
          %s209 = sshll.u32 [#allocation7], 4
          %s210 = int_to_ptr.vmem [resolvable:$true] %s209
          %215 = dma.hbm_to_vmem [thread:$0]  %s3, 512, %s210, [#allocation6], 128, 128, 8
        $region16: #{tpu_custom_call.1} parent=11 // pred_fallthru
          _
        // Predicated region
        $region17: #{tpu_custom_call.1} parent=11 // pred_check
          %p216 = pneg %p141
        $region18: #{tpu_custom_call.1} parent=11 // pred_check_branch
          %218 = sbr.rel (%p216) target = $region20
        $region19: #{tpu_custom_call.1} parent=11 // pred_region
          _
        $region20: #{tpu_custom_call.1} parent=11 // pred_fallthru
          _
        // Predicated region
        $region21: #{tpu_custom_call.1} parent=11 // pred_check
          %p219 = pneg %p162
        $region22: #{tpu_custom_call.1} parent=11 // pred_check_branch
          %221 = sbr.rel (%p219) target = $region24
        $region23: #{tpu_custom_call.1} parent=11 // pred_region
          _
        $region24: #{tpu_custom_call.1} parent=11 // pred_fallthru
          _
      $region12: #{tpu_custom_call.1} parent=5 // pred_fallthru
        _
      %p222 = scmp.lt.s32.totalorder %s21, 2
      // Predicated region
      $region25: #{tpu_custom_call.1} parent=5 // pred_check
        %p223 = pneg %p222
      $region26: #{tpu_custom_call.1} parent=5 // pred_check_branch
        %225 = sbr.rel (%p223) target = $region28
      $region27: #{tpu_custom_call.1} parent=5 // pred_region
        // Predicated region
        $region29: #{tpu_custom_call.1} parent=27 // pred_check
          %p226 = pneg %p41
        $region30: #{tpu_custom_call.1} parent=27 // pred_check_branch
          %228 = sbr.rel (%p226) target = $region32
        $region31: #{tpu_custom_call.1} parent=27 // pred_region
          %s229 = sand.u32 %s31, 1
          %s230 = scalar_lea.sflag [#allocation3], %s229
          %s231 = sand.u32 %s31, 1
          %s232 = smul.addr %s231, 8
          %s233 = scalar_lea.vmem [#allocation2], %s232
          %s235 = ssub.s32 128, 128
          %236 = vsyncadd %s230, %s235
          %s237 = smul.addr %s21, 128
          %s238 = scalar_lea.hbm %s0, %s237
          %s240 = sshll.u32 %s233, 4
          %s241 = int_to_ptr.vmem [resolvable:$true] %s240
          %243 = dma.hbm_to_vmem [thread:$0]  %s238, 128, %s241, %s230
        $region32: #{tpu_custom_call.1} parent=27 // pred_fallthru
          _
        // Predicated region
        $region33: #{tpu_custom_call.1} parent=27 // pred_check
          %p244 = pneg %p67
        $region34: #{tpu_custom_call.1} parent=27 // pred_check_branch
          %246 = sbr.rel (%p244) target = $region36
        $region35: #{tpu_custom_call.1} parent=27 // pred_region
          %p247 = scmp.lt.s32.totalorder %s21, 1
          %s248 = scalar_select %p247, %s21, 1
          %s249 = smul.addr %s248, 8
          %s250 = scalar_lea.vmem %s1, %s249
        $region36: #{tpu_custom_call.1} parent=27 // pred_fallthru
          _
        // Predicated region
        $region37: #{tpu_custom_call.1} parent=27 // pred_check
          %p251 = pneg %p93
        $region38: #{tpu_custom_call.1} parent=27 // pred_check_branch
          %253 = sbr.rel (%p251) target = $region40
        $region39: #{tpu_custom_call.1} parent=27 // pred_region
          %s254 = sand.u32 %s21, 1
          %s255 = scalar_lea.sflag [#allocation6], %s254
          %s256 = sand.u32 %s83, 1
          %s257 = smul.addr %s256, 8
          %s258 = scalar_lea.vmem [#allocation5], %s257
          %s260 = ssub.s32 128, 128
          %261 = vsyncadd %s255, %s260
          %s262 = smul.addr %s21, 128
          %s263 = scalar_lea.hbm %s2, %s262
          %s265 = sshll.u32 %s258, 4
          %s266 = int_to_ptr.vmem [resolvable:$true] %s265
          %268 = dma.hbm_to_vmem [thread:$0]  %s263, 128, %s266, %s255
        $region40: #{tpu_custom_call.1} parent=27 // pred_fallthru
          _
      $region28: #{tpu_custom_call.1} parent=5 // pred_fallthru
        _
      %p269 = scmp.le.s32.totalorder 1, %s21
      %p270 = scmp.lt.s32.totalorder %s21, 3
      %p271 = pnand %p269, %p270
      %p272 = pneg %p271
      // Predicated region
      $region41: #{tpu_custom_call.1} parent=5 // pred_check
        _
      $region42: #{tpu_custom_call.1} parent=5 // pred_check_branch
        %274 = sbr.rel (%p271) target = $region44
      $region43: #{tpu_custom_call.1} parent=5 // pred_region
        %s275 = ssub.s32 %s21, 1
        %s276 = sand.u32 %s34, 1
        %s277 = scalar_lea.sflag [#allocation3], %s276
        %s278 = sand.u32 %s34, 1
        %s279 = smul.addr %s278, 8
        %s280 = scalar_lea.vmem [#allocation2], %s279
        // Predicated region
        $region45: #{tpu_custom_call.1} parent=43 // pred_check
          %p281 = pneg %p47
        $region46: #{tpu_custom_call.1} parent=43 // pred_check_branch
          %283 = sbr.rel (%p281) target = $region48
        $region47: #{tpu_custom_call.1} parent=43 // pred_region
          %284 = dma.done %s277, 128
        $region48: #{tpu_custom_call.1} parent=43 // pred_fallthru
          _
        %s285 = sand.u32 %s26, 1
        %s286 = scalar_lea.sflag [#allocation6], %s285
        %s287 = sand.u32 %s86, 1
        %s288 = smul.addr %s287, 8
        %s289 = scalar_lea.vmem [#allocation5], %s288
        // Predicated region
        $region49: #{tpu_custom_call.1} parent=43 // pred_check
          %p290 = pneg %p99
        $region50: #{tpu_custom_call.1} parent=43 // pred_check_branch
          %292 = sbr.rel (%p290) target = $region52
        $region51: #{tpu_custom_call.1} parent=43 // pred_region
          %293 = dma.done %s286, 128
        $region52: #{tpu_custom_call.1} parent=43 // pred_fallthru
          _
        // Predicated region
        $region53: #{tpu_custom_call.1} parent=43 // pred_check
          %p294 = pneg %p120
        $region54: #{tpu_custom_call.1} parent=43 // pred_check_branch
          %296 = sbr.rel (%p294) target = $region56
        $region55: #{tpu_custom_call.1} parent=43 // pred_region
          %297 = dma.done [#allocation6], 512
        $region56: #{tpu_custom_call.1} parent=43 // pred_fallthru
          _
        %s298 = sand.u32 %s34, 1
        %s299 = scalar_lea.sflag [#allocation3], %s298
        %s300 = sand.u32 %s34, 1
        %s301 = smul.addr %s300, 8
        %s302 = scalar_lea.vmem [#allocation2], %s301
        %p303 = pneg %p47
        %p304 = pneg %p44
        %p305 = scmp.lt.s32.totalorder %s26, 1
        %s306 = scalar_select %p305, %s26, 1
        %s307 = smul.addr %s306, 8
        %s308 = scalar_lea.vmem %s1, %s307
        %p309 = pneg %p73
        %p310 = pneg %p70
        %s311 = sand.u32 %s26, 1
        %s312 = scalar_lea.sflag [#allocation6], %s311
        %s313 = sand.u32 %s86, 1
        %s314 = smul.addr %s313, 8
        %s315 = scalar_lea.vmem [#allocation5], %s314
        %p316 = pneg %p99
        %p317 = pneg %p96
        %p318 = pneg %p120
        %p319 = pneg %p117
        %p320 = pneg %p141
        %p321 = pneg %p138
        %p322 = pneg %p162
        %p323 = pneg %p159
        %p324 = pneg %p188
        %p325 = pneg %p185
        %s326 = sand.u32 %s175, 1
        %s327 = scalar_lea.sflag [#allocation4], %s326
        %s328 = sand.u32 %s175, 1
        %s329 = smul.addr %s328, 8
        %s330 = scalar_lea.vmem [#allocation8], %s329
        %p331 = scmp.lt.s32.totalorder %s26, 1
        %s332 = scalar_select %p331, %s26, 1
        %s333 = smul.addr %s332, 8
        %s334 = scalar_lea.vmem %s1, %s333
        %v335 = vld [vmem:[%s280] sm:$0xff]
        %v336 = vld [vmem:[%s289] sm:$0xff]
        %337 = vxpose.xlu0.b32.start [1/16] %v335, 128
        %338 = vxpose.xlu0.b32.cont [2/16] 0.0, 128
        %339 = vxpose.xlu0.b32.cont [3/16] 0.0, 128
        %340 = vxpose.xlu0.b32.cont [4/16] 0.0, 128
        %341 = vxpose.xlu0.b32.cont [5/16] 0.0, 128
        %342 = vxpose.xlu0.b32.cont [6/16] 0.0, 128
        %343 = vxpose.xlu0.b32.cont [7/16] 0.0, 128
        %344 = vxpose.xlu0.b32.cont [8/16] 0.0, 128
        %345 = vxpose.xlu0.b32.cont [9/16] 0.0, 128
        %346 = vxpose.xlu0.b32.cont [10/16] 0.0, 128
        %347 = vxpose.xlu0.b32.cont [11/16] 0.0, 128
        %348 = vxpose.xlu0.b32.cont [12/16] 0.0, 128
        %349 = vxpose.xlu0.b32.cont [13/16] 0.0, 128
        %350 = vxpose.xlu0.b32.cont [14/16] 0.0, 128
        %351 = vxpose.xlu0.b32.cont [15/16] 0.0, 128
        %352 = vxpose.xlu0.b32.end [16/16] 0.0, 128
        %v353 = vpop.trf.xlu0
        %v354 = vpop.trf.xlu0
        %v355 = vpop.trf.xlu0
        %v356 = vpop.trf.xlu0
        %v357 = vpop.trf.xlu0
        %v358 = vpop.trf.xlu0
        %v359 = vpop.trf.xlu0
        %v360 = vpop.trf.xlu0
        %v361 = vpop.trf.xlu0
        %v362 = vpop.trf.xlu0
        %v363 = vpop.trf.xlu0
        %v364 = vpop.trf.xlu0
        %v365 = vpop.trf.xlu0
        %v366 = vpop.trf.xlu0
        %v367 = vpop.trf.xlu0
        %v368 = vpop.trf.xlu0
        %vm369 = vcmask 64512
        %v371 = vsel %vm369, %v353, 0
        %373 = vmatprep.subr.mxu0 0.0
        %374 = vmatpush1.msra.mxu0 %v336
        %375 = vmatprep.subr.mxu0 0.0
        %376 = vmatpush1.msra.mxu0 0.0
        %377 = vmatprep.subr.mxu0 0.0
        %378 = vmatpush1.msra.mxu0 0.0
        %379 = vmatprep.subr.mxu0 0.0
        %380 = vmatpush1.msra.mxu0 0.0
        %381 = vmatprep.subr.mxu0 0.0
        %382 = vmatpush1.msra.mxu0 0.0
        %383 = vmatprep.subr.mxu0 0.0
        %384 = vmatpush1.msra.mxu0 0.0
        %385 = vmatprep.subr.mxu0 0.0
        %386 = vmatpush1.msra.mxu0 0.0
        %387 = vmatprep.subr.mxu0 0.0
        %388 = vmatpush1.msra.mxu0 0.0
        %389 = vmatprep.subr.mxu0 0.0
        %390 = vmatpush1.msra.mxu0 0.0
        %391 = vmatprep.subr.mxu0 0.0
        %392 = vmatpush1.msra.mxu0 0.0
        %393 = vmatprep.subr.mxu0 0.0
        %394 = vmatpush1.msra.mxu0 0.0
        %395 = vmatprep.subr.mxu0 0.0
        %396 = vmatpush1.msra.mxu0 0.0
        %397 = vmatprep.subr.mxu0 0.0
        %398 = vmatpush1.msra.mxu0 0.0
        %399 = vmatprep.subr.mxu0 0.0
        %400 = vmatpush1.msra.mxu0 0.0
        %401 = vmatprep.subr.mxu0 0.0
        %402 = vmatpush1.msra.mxu0 0.0
        %403 = vmatprep.subr.mxu0 0.0
        %404 = vmatpush1.msra.mxu0 0.0
        %405 = vmatprep.subr.mxu0 0.0
        %406 = vmatpush1.msra.mxu0 0.0
        %407 = vmatprep.subr.mxu0 0.0
        %408 = vmatpush1.msra.mxu0 0.0
        %409 = vmatprep.subr.mxu0 0.0
        %410 = vmatpush1.msra.mxu0 0.0
        %411 = vmatprep.subr.mxu0 0.0
        %412 = vmatpush1.msra.mxu0 0.0
        %413 = vmatprep.subr.mxu0 0.0
        %414 = vmatpush1.msra.mxu0 0.0
        %415 = vmatprep.subr.mxu0 0.0
        %416 = vmatpush1.msra.mxu0 0.0
        %417 = vmatprep.subr.mxu0 0.0
        %418 = vmatpush1.msra.mxu0 0.0
        %419 = vmatprep.subr.mxu0 0.0
        %420 = vmatpush1.msra.mxu0 0.0
        %421 = vmatprep.subr.mxu0 0.0
        %422 = vmatpush1.msra.mxu0 0.0
        %423 = vmatprep.subr.mxu0 0.0
        %424 = vmatpush1.msra.mxu0 0.0
        %425 = vmatprep.subr.mxu0 0.0
        %426 = vmatpush1.msra.mxu0 0.0
        %427 = vmatprep.subr.mxu0 0.0
        %428 = vmatpush1.msra.mxu0 0.0
        %429 = vmatprep.subr.mxu0 0.0
        %430 = vmatpush1.msra.mxu0 0.0
        %431 = vmatprep.subr.mxu0 0.0
        %432 = vmatpush1.msra.mxu0 0.0
        %433 = vmatprep.subr.mxu0 0.0
        %434 = vmatpush1.msra.mxu0 0.0
        %435 = vmatprep.subr.mxu0 0.0
        %436 = vmatpush1.msra.mxu0 0.0
        %437 = vmatprep.mubr.f32.mxu0 0.0
        %438 = vmatmul.mubr.f32.gmra.mrb[0].mxu0 %v371
        %v439 = vpop.f32.mrb[0].mxu0
        %v440 = vadd.f32 0.0, %v439
        %v441 = vpop.f32.mrb[0].mxu0
        %442 = vdwg.mxu0
        %v443 = vld [vmem:[%s334] sm:$0xff]
        %445 = vset.pattern.permute.xlu0 0
        %446 = vperm.xlu0 %445, %v443
        %v447 = vpop.permute.xlu0 %446
        %v449 = vmul.f32 %v440, %v447
        %v450 = vld [vmem:[#allocation7] sm:$0xff]
        %v451 = vld [vmem:[#allocation7 + $0x8] sm:$0xff]
        %v452 = vld [vmem:[#allocation7 + $0x10] sm:$0xff]
        %v453 = vld [vmem:[#allocation7 + $0x18] sm:$0xff]
        %v454 = vld [vmem:[%s4] sm:$0xff]
        %v455 = vld [vmem:[%s4 + $0x8] sm:$0xff]
        %v456 = vld [vmem:[%s4 + $0x10] sm:$0xff]
        %v457 = vld [vmem:[%s4 + $0x18] sm:$0xff]
        %vm458 = vcmask 261120
        %v460 = vsel %vm458, %v449, 0
        %462 = vmatprep.subr.mxu0 0.0
        %463 = vmatpush1.msra.mxu0 %v454
        %464 = vmatprep.subr.mxu0 0.0
        %465 = vmatpush1.msra.mxu0 %v455
        %466 = vmatprep.subr.mxu0 0.0
        %467 = vmatpush1.msra.mxu0 %v456
        %468 = vmatprep.subr.mxu0 0.0
        %469 = vmatpush1.msra.mxu0 %v457
        %470 = vmatprep.subr.mxu0 0.0
        %471 = vmatpush1.msra.mxu0 0.0
        %472 = vmatprep.subr.mxu0 0.0
        %473 = vmatpush1.msra.mxu0 0.0
        %474 = vmatprep.subr.mxu0 0.0
        %475 = vmatpush1.msra.mxu0 0.0
        %476 = vmatprep.subr.mxu0 0.0
        %477 = vmatpush1.msra.mxu0 0.0
        %478 = vmatprep.subr.mxu0 0.0
        %479 = vmatpush1.msra.mxu0 0.0
        %480 = vmatprep.subr.mxu0 0.0
        %481 = vmatpush1.msra.mxu0 0.0
        %482 = vmatprep.subr.mxu0 0.0
        %483 = vmatpush1.msra.mxu0 0.0
        %484 = vmatprep.subr.mxu0 0.0
        %485 = vmatpush1.msra.mxu0 0.0
        %486 = vmatprep.subr.mxu0 0.0
        %487 = vmatpush1.msra.mxu0 0.0
        %488 = vmatprep.subr.mxu0 0.0
        %489 = vmatpush1.msra.mxu0 0.0
        %490 = vmatprep.subr.mxu0 0.0
        %491 = vmatpush1.msra.mxu0 0.0
        %492 = vmatprep.subr.mxu0 0.0
        %493 = vmatpush1.msra.mxu0 0.0
        %494 = vmatprep.subr.mxu0 0.0
        %495 = vmatpush1.msra.mxu0 0.0
        %496 = vmatprep.subr.mxu0 0.0
        %497 = vmatpush1.msra.mxu0 0.0
        %498 = vmatprep.subr.mxu0 0.0
        %499 = vmatpush1.msra.mxu0 0.0
        %500 = vmatprep.subr.mxu0 0.0
        %501 = vmatpush1.msra.mxu0 0.0
        %502 = vmatprep.subr.mxu0 0.0
        %503 = vmatpush1.msra.mxu0 0.0
        %504 = vmatprep.subr.mxu0 0.0
        %505 = vmatpush1.msra.mxu0 0.0
        %506 = vmatprep.subr.mxu0 0.0
        %507 = vmatpush1.msra.mxu0 0.0
        %508 = vmatprep.subr.mxu0 0.0
        %509 = vmatpush1.msra.mxu0 0.0
        %510 = vmatprep.subr.mxu0 0.0
        %511 = vmatpush1.msra.mxu0 0.0
        %512 = vmatprep.subr.mxu0 0.0
        %513 = vmatpush1.msra.mxu0 0.0
        %514 = vmatprep.subr.mxu0 0.0
        %515 = vmatpush1.msra.mxu0 0.0
        %516 = vmatprep.subr.mxu0 0.0
        %517 = vmatpush1.msra.mxu0 0.0
        %518 = vmatprep.subr.mxu0 0.0
        %519 = vmatpush1.msra.mxu0 0.0
        %520 = vmatprep.subr.mxu0 0.0
        %521 = vmatpush1.msra.mxu0 0.0
        %522 = vmatprep.subr.mxu0 0.0
        %523 = vmatpush1.msra.mxu0 0.0
        %524 = vmatprep.subr.mxu0 0.0
        %525 = vmatpush1.msra.mxu0 0.0
        %526 = vmatprep.mubr.f32.mxu0 0.0
        %527 = vmatmul.mubr.f32.gmra.mrb[0].mxu0 %v460
        %v528 = vpop.f32.mrb[0].mxu0
        %v529 = vadd.f32 0.0, %v528
        %v530 = vpop.f32.mrb[0].mxu0
        %531 = vdwg.mxu0
        %v533 = vsel %vm458, %v336, 0
        %535 = vmatprep.subr.mxu0 0.0
        %536 = vmatpush1.msra.mxu0 %v450
        %537 = vmatprep.subr.mxu0 0.0
        %538 = vmatpush1.msra.mxu0 %v451
        %539 = vmatprep.subr.mxu0 0.0
        %540 = vmatpush1.msra.mxu0 %v452
        %541 = vmatprep.subr.mxu0 0.0
        %542 = vmatpush1.msra.mxu0 %v453
        %543 = vmatprep.subr.mxu0 0.0
        %544 = vmatpush1.msra.mxu0 0.0
        %545 = vmatprep.subr.mxu0 0.0
        %546 = vmatpush1.msra.mxu0 0.0
        %547 = vmatprep.subr.mxu0 0.0
        %548 = vmatpush1.msra.mxu0 0.0
        %549 = vmatprep.subr.mxu0 0.0
        %550 = vmatpush1.msra.mxu0 0.0
        %551 = vmatprep.subr.mxu0 0.0
        %552 = vmatpush1.msra.mxu0 0.0
        %553 = vmatprep.subr.mxu0 0.0
        %554 = vmatpush1.msra.mxu0 0.0
        %555 = vmatprep.subr.mxu0 0.0
        %556 = vmatpush1.msra.mxu0 0.0
        %557 = vmatprep.subr.mxu0 0.0
        %558 = vmatpush1.msra.mxu0 0.0
        %559 = vmatprep.subr.mxu0 0.0
        %560 = vmatpush1.msra.mxu0 0.0
        %561 = vmatprep.subr.mxu0 0.0
        %562 = vmatpush1.msra.mxu0 0.0
        %563 = vmatprep.subr.mxu0 0.0
        %564 = vmatpush1.msra.mxu0 0.0
        %565 = vmatprep.subr.mxu0 0.0
        %566 = vmatpush1.msra.mxu0 0.0
        %567 = vmatprep.subr.mxu0 0.0
        %568 = vmatpush1.msra.mxu0 0.0
        %569 = vmatprep.subr.mxu0 0.0
        %570 = vmatpush1.msra.mxu0 0.0
        %571 = vmatprep.subr.mxu0 0.0
        %572 = vmatpush1.msra.mxu0 0.0
        %573 = vmatprep.subr.mxu0 0.0
        %574 = vmatpush1.msra.mxu0 0.0
        %575 = vmatprep.subr.mxu0 0.0
        %576 = vmatpush1.msra.mxu0 0.0
        %577 = vmatprep.subr.mxu0 0.0
        %578 = vmatpush1.msra.mxu0 0.0
        %579 = vmatprep.subr.mxu0 0.0
        %580 = vmatpush1.msra.mxu0 0.0
        %581 = vmatprep.subr.mxu0 0.0
        %582 = vmatpush1.msra.mxu0 0.0
        %583 = vmatprep.subr.mxu0 0.0
        %584 = vmatpush1.msra.mxu0 0.0
        %585 = vmatprep.subr.mxu0 0.0
        %586 = vmatpush1.msra.mxu0 0.0
        %587 = vmatprep.subr.mxu0 0.0
        %588 = vmatpush1.msra.mxu0 0.0
        %589 = vmatprep.subr.mxu0 0.0
        %590 = vmatpush1.msra.mxu0 0.0
        %591 = vmatprep.subr.mxu0 0.0
        %592 = vmatpush1.msra.mxu0 0.0
        %593 = vmatprep.subr.mxu0 0.0
        %594 = vmatpush1.msra.mxu0 0.0
        %595 = vmatprep.subr.mxu0 0.0
        %596 = vmatpush1.msra.mxu0 0.0
        %597 = vmatprep.subr.mxu0 0.0
        %598 = vmatpush1.msra.mxu0 0.0
        %599 = vmatprep.mubr.f32.mxu0 0.0
        %600 = vmatmul.mubr.f32.gmra.mrb[0].mxu0 %v533
        %v601 = vpop.f32.mrb[0].mxu0
        %v602 = vadd.f32 %v529, %v601
        %v603 = vpop.f32.mrb[0].mxu0
        %604 = vdwg.mxu0
        %v605 = vld [vmem:[%s5] sm:$0x1]
        %v607 = vlaneseq
        %v608 = vshrl.u32 %v607, 7
        %v609 = vsub.s32 0, %v608
        %v610 = vrot.slane %v605, %v609
        %v612 = vadd.f32 %v602, %v610
        %v613 = vmax.f32 %v612, 0.0
        %614 = vst.msk [vmem:[%s330] sm:$0xff] %vm458, %v613
        %s615 = sand.u32 %s175, 1
        %s616 = scalar_lea.sflag [#allocation4], %s615
        %s617 = sand.u32 %s175, 1
        %s618 = smul.addr %s617, 8
        %s619 = scalar_lea.vmem [#allocation8], %s618
        // Predicated region
        $region57: #{tpu_custom_call.1} parent=43 // pred_check
          %p620 = pneg %p185
        $region58: #{tpu_custom_call.1} parent=43 // pred_check_branch
          %622 = sbr.rel (%p620) target = $region60
        $region59: #{tpu_custom_call.1} parent=43 // pred_region
          %s624 = ssub.s32 128, 128
          %625 = vsyncadd %s616, %s624
          %s626 = smul.addr %s26, 128
          %s627 = scalar_lea.hbm %s6, %s626
          %s629 = sshll.u32 %s619, 4
          %s630 = int_to_ptr.vmem [resolvable:$true] %s629
          %632 = dma.vmem_to_hbm [thread:$0]  %s630, 128, %s627, %s616
        $region60: #{tpu_custom_call.1} parent=43 // pred_fallthru
          _
      $region44: #{tpu_custom_call.1} parent=5 // pred_fallthru
        _
      %p633 = scmp.le.s32.totalorder 2, %s21
      // Predicated region
      $region61: #{tpu_custom_call.1} parent=5 // pred_check
        %p634 = pneg %p633
      $region62: #{tpu_custom_call.1} parent=5 // pred_check_branch
        %636 = sbr.rel (%p634) target = $region64
      $region63: #{tpu_custom_call.1} parent=5 // pred_region
        %s637 = ssub.s32 %s21, 2
        // Predicated region
        $region65: #{tpu_custom_call.1} parent=63 // pred_check
          %p638 = pneg %p191
        $region66: #{tpu_custom_call.1} parent=63 // pred_check_branch
          %640 = sbr.rel (%p638) target = $region68
        $region67: #{tpu_custom_call.1} parent=63 // pred_region
          %s641 = sand.u32 %s176, 1
          %s642 = scalar_lea.sflag [#allocation4], %s641
          %s643 = sand.u32 %s176, 1
          %s644 = smul.addr %s643, 8
          %s645 = scalar_lea.vmem [#allocation8], %s644
          %646 = dma.done %s642, 128
        $region68: #{tpu_custom_call.1} parent=63 // pred_fallthru
          _
      $region64: #{tpu_custom_call.1} parent=5 // pred_fallthru
        _
    $region6: #{tpu_custom_call.1} parent=1 // loop_footer
      %s25 = sadd.s32 1, %s21
    $region7: #{tpu_custom_call.1} parent=1 // loop_footer_branch
      %20 = sbr.rel target = $region3
    $region8: #{tpu_custom_call.1} parent=1 // loop_exit
      _
    %647 = vsyncpa [#allocation3], 1
    %s648 = scalar_lea.sflag [#allocation3], 1
    %649 = vsyncpa %s648, 1
    %650 = vsyncpa [#allocation6], 1
    %s651 = scalar_lea.sflag [#allocation6], 1
    %652 = vsyncpa %s651, 1
    %653 = vsyncpa [#allocation4], 1
    %s654 = scalar_lea.sflag [#allocation4], 1
    %655 = vsyncpa %s654, 1

</llo_original>
